<compile_context>
chip_gen: v7x
topology: tpu7x:2x2x1
jax: 0.10.0
libtpu: 0.0.40
codegen_flags: <defaults>
</compile_context>

<pallas_src>
import jax
import jax.numpy as jnp
from jax.experimental import pallas as pl
from jax.experimental.pallas import tpu as pltpu

HIDDEN = 400        # fixed by the PyTorch module: nn.Linear(data_dim, 400)
HIDDEN_PAD = 512    # zero-padded hidden width used inside the kernel


# --------------------------- fused forward kernel ---------------------------
def _vae_fwd_kernel(x_ref, eps_ref, w1_ref, b1_ref, wh_ref, bh_ref,
                    w3_ref, b3_ref, w4_ref, b4_ref,
                    recon_ref, heads_ref):
    z_dim = eps_ref.shape[-1]

    # encode: h1 = relu(x @ W1 + b1)        (bf16 operands, f32 accumulate)
    h1 = jnp.dot(x_ref[...].astype(jnp.bfloat16), w1_ref[...],
                 preferred_element_type=jnp.float32)
    h1 = jnp.maximum(h1 + b1_ref[...], 0.0)

    # fused latent heads: [mu | logvar] = h1 @ [W21 | W22] + [b21 | b22]
    heads = jnp.dot(h1.astype(jnp.bfloat16), wh_ref[...],
                    preferred_element_type=jnp.float32) + bh_ref[...]
    heads_ref[...] = heads                                   # single writeback

    mu = heads[:, :z_dim]
    logvar = heads[:, z_dim:]

    # reparameterize: z = mu + eps * exp(0.5 * logvar)       (all f32)
    z = mu + eps_ref[...] * jnp.exp(0.5 * logvar)

    # decode: recon = sigmoid(relu(z @ W3 + b3) @ W4 + b4)
    h3 = jnp.dot(z.astype(jnp.bfloat16), w3_ref[...],
                 preferred_element_type=jnp.float32)
    h3 = jnp.maximum(h3 + b3_ref[...], 0.0)
    logits = jnp.dot(h3.astype(jnp.bfloat16), w4_ref[...],
                     preferred_element_type=jnp.float32) + b4_ref[...]
    recon_ref[...] = jax.nn.sigmoid(logits)


# ------------------------------- host wrapper --------------------------------
def vanilla_vae_forward(x, eps, prepared, *, row_tile=512):
    """Returns (recon, mu, logvar) — matches VanillaVAE.forward."""
    data_dim = prepared["w1"].shape[0]
    hid_pad = prepared["w1"].shape[1]
    z_dim = prepared["wh"].shape[1] // 2

    x2 = x.reshape(-1, data_dim).astype(jnp.float32)         # x.view(-1, data_dim)
    eps2 = eps.reshape(-1, z_dim).astype(jnp.float32)
    n = x2.shape[0]

    # batch-row tile: multiple of 8 sublanes, capped at row_tile; shrink so
    # there are >= 2 grid programs when the batch allows (v7x has 2 TCs).
    tb = max(8, min(row_tile, ((n + 7) // 8) * 8))
    tb = (tb // 8) * 8
    while tb > 8 and pl.cdiv(n, tb) < 2:
        tb = max(8, ((tb // 2 + 7) // 8) * 8)
    grid = (pl.cdiv(n, tb),)     # partial last block handled by Pallas

    def row_spec(cols):
        return pl.BlockSpec((tb, cols), lambda i: (i, 0))

    def full_spec(shape):
        # Weights/biases: constant block index -> resident across the grid.
        # (On v7x one could add pipeline_mode=pl.Buffered(1) to skip the
        #  second buffer; at these sizes it is ~1 MiB so we keep the default.)
        return pl.BlockSpec(shape, lambda i: (0,) * len(shape))

    recon, heads = pl.pallas_call(
        _vae_fwd_kernel,
        out_shape=(jax.ShapeDtypeStruct((n, data_dim), jnp.float32),
                   jax.ShapeDtypeStruct((n, 2 * z_dim), jnp.float32)),
        grid=grid,
        in_specs=[
            row_spec(data_dim),                # x rows
            row_spec(z_dim),                   # eps rows
            full_spec((data_dim, hid_pad)),    # W1           (bf16)
            full_spec((1, hid_pad)),           # b1           (f32)
            full_spec((hid_pad, 2 * z_dim)),   # [W21 | W22]  (bf16)
            full_spec((1, 2 * z_dim)),         # [b21 | b22]  (f32)
            full_spec((z_dim, hid_pad)),       # W3           (bf16)
            full_spec((1, hid_pad)),           # b3           (f32)
            full_spec((hid_pad, data_dim)),    # W4           (bf16)
            full_spec((1, data_dim)),          # b4           (f32)
        ],
        out_specs=(row_spec(data_dim), row_spec(2 * z_dim)),
        compiler_params=pltpu.CompilerParams(
            dimension_semantics=("parallel",),
            vmem_limit_bytes=32 * 1024 * 1024),
    )(x2, eps2,
      prepared["w1"], prepared["b1"], prepared["wh"], prepared["bh"],
      prepared["w3"], prepared["b3"], prepared["w4"], prepared["b4"])

    mu = heads[:, :z_dim]
    logvar = heads[:, z_dim:]
    return recon, mu, logvar


# ------------------------------ params & packing ------------------------------
def init_params(key, data_dim, z_dim):
    """Canonical f32 parameters, pre-transposed to (in, out), HIDDEN=400."""
    ks = jax.random.split(key, 5)
    n = lambda k, s, sc=0.05: (sc * jax.random.normal(k, s)).astype(jnp.float32)
    return {
        "w1": n(ks[0], (data_dim, HIDDEN)),
        "b1": jnp.zeros((1, HIDDEN), jnp.float32),
        "wh": n(ks[1], (HIDDEN, 2 * z_dim)),          # [fc21.W^T | fc22.W^T]
        "bh": jnp.zeros((1, 2 * z_dim), jnp.float32),
        "w3": n(ks[2], (z_dim, HIDDEN)),
        "b3": jnp.zeros((1, HIDDEN), jnp.float32),
        "w4": n(ks[3], (HIDDEN, data_dim)),
        "b4": jnp.zeros((1, data_dim), jnp.float32),
    }


def prepare_params(p):
    """Zero-pad HIDDEN 400 -> 512 and cast weights to bf16 (biases stay f32)."""
    pad = HIDDEN_PAD - p["w1"].shape[1]
    padc = lambda a: jnp.pad(a, ((0, 0), (0, pad)))   # pad hidden as out-features
    padr = lambda a: jnp.pad(a, ((0, pad), (0, 0)))   # pad hidden as in-features
    return {
        "w1": padc(p["w1"]).astype(jnp.bfloat16),
        "b1": padc(p["b1"]).astype(jnp.float32),
        "wh": padr(p["wh"]).astype(jnp.bfloat16),
        "bh": p["bh"].astype(jnp.float32),
        "w3": padc(p["w3"]).astype(jnp.bfloat16),
        "b3": padc(p["b3"]).astype(jnp.float32),
        "w4": padr(p["w4"]).astype(jnp.bfloat16),
        "b4": p["b4"].astype(jnp.float32),
    }


# ------------------------------ pure-JAX reference ----------------------------
def vae_ref(x, eps, p):
    data_dim = p["w1"].shape[0]
    z_dim = p["wh"].shape[1] // 2
    x2 = x.reshape(-1, data_dim)
    h1 = jax.nn.relu(x2 @ p["w1"] + p["b1"])
    heads = h1 @ p["wh"] + p["bh"]
    mu, logvar = heads[:, :z_dim], heads[:, z_dim:]
    z = mu + eps.reshape(-1, z_dim) * jnp.exp(0.5 * logvar)
    h3 = jax.nn.relu(z @ p["w3"] + p["b3"])
    recon = jax.nn.sigmoid(h3 @ p["w4"] + p["b4"])
    return recon, mu, logvar


# ----------------------------------- main -------------------------------------
if __name__ == "__main__":
    batch, spatial, z_dim = 2, 16, 8
    data_dim = spatial * spatial

    key = jax.random.PRNGKey(0)
    kx, ke, kp = jax.random.split(key, 3)
    x = jax.random.normal(kx, (batch, 1, spatial, spatial), dtype=jnp.float32)
    eps = jax.random.normal(ke, (batch, z_dim), dtype=jnp.float32)

    params = init_params(kp, data_dim, z_dim)     # f32 module-faithful params
    prepared = prepare_params(params)             # padded + bf16 kernel params

    recon, mu, logvar = vanilla_vae_forward(x, eps, prepared)
    jax.block_until_ready((recon, mu, logvar))

    assert recon.shape == (batch, data_dim)
    assert mu.shape == (batch, z_dim)
    assert logvar.shape == (batch, z_dim)
    assert bool(jnp.all(jnp.isfinite(recon)))
    assert bool(jnp.all(jnp.isfinite(mu)))
    assert bool(jnp.all(jnp.isfinite(logvar)))

    # f32 reference; tolerance relaxed for the bf16-operand matmuls.
    r_ref, mu_ref, lv_ref = vae_ref(x, eps, params)
    assert bool(jnp.allclose(recon, r_ref, atol=2e-2, rtol=2e-2))
    assert bool(jnp.allclose(mu, mu_ref, atol=2e-2, rtol=2e-2))
    assert bool(jnp.allclose(logvar, lv_ref, atol=2e-2, rtol=2e-2))

    print("KERNEL_OK")
</pallas_src>

<mosaic_0001>
module attributes {stable_mosaic.version = 11 : i64} {
  func.func @_vae_fwd_kernel(%arg0: i32, %arg1: memref<8x256xf32, #tpu.memory_space<vmem>>, %arg2: memref<8x8xf32, #tpu.memory_space<vmem>>, %arg3: memref<256x512xbf16, #tpu.memory_space<vmem>>, %arg4: memref<1x512xf32, #tpu.memory_space<vmem>>, %arg5: memref<512x16xbf16, #tpu.memory_space<vmem>>, %arg6: memref<1x16xf32, #tpu.memory_space<vmem>>, %arg7: memref<8x512xbf16, #tpu.memory_space<vmem>>, %arg8: memref<1x512xf32, #tpu.memory_space<vmem>>, %arg9: memref<512x256xbf16, #tpu.memory_space<vmem>>, %arg10: memref<1x256xf32, #tpu.memory_space<vmem>>, %arg11: memref<8x256xf32, #tpu.memory_space<vmem>>, %arg12: memref<8x16xf32, #tpu.memory_space<vmem>>) attributes {dimension_semantics = [#tpu.dimension_semantics<parallel>], iteration_bounds = array<i64: 1>, scalar_prefetch = 0 : i64, scratch_operands = 0 : i64, tpu.core_type = #tpu.core_type<tc>, window_params = [{transform_indices = @transform_0, window_bounds = array<i64: 8, 256>}, {transform_indices = @transform_1, window_bounds = array<i64: 8, 8>}, {pipeline_mode = #tpu.pipeline_mode<synchronous>, transform_indices = @transform_2, window_bounds = array<i64: 256, 512>}, {pipeline_mode = #tpu.pipeline_mode<synchronous>, transform_indices = @transform_3, window_bounds = array<i64: 1, 512>}, {pipeline_mode = #tpu.pipeline_mode<synchronous>, transform_indices = @transform_4, window_bounds = array<i64: 512, 16>}, {pipeline_mode = #tpu.pipeline_mode<synchronous>, transform_indices = @transform_5, window_bounds = array<i64: 1, 16>}, {pipeline_mode = #tpu.pipeline_mode<synchronous>, transform_indices = @transform_6, window_bounds = array<i64: 8, 512>}, {pipeline_mode = #tpu.pipeline_mode<synchronous>, transform_indices = @transform_7, window_bounds = array<i64: 1, 512>}, {pipeline_mode = #tpu.pipeline_mode<synchronous>, transform_indices = @transform_8, window_bounds = array<i64: 512, 256>}, {pipeline_mode = #tpu.pipeline_mode<synchronous>, transform_indices = @transform_9, window_bounds = array<i64: 1, 256>}, {transform_indices = @transform_10, window_bounds = array<i64: 8, 256>}, {transform_indices = @transform_11, window_bounds = array<i64: 8, 16>}]} {
    %c0 = arith.constant 0 : index
    %c0_0 = arith.constant 0 : index
    %0 = vector.load %arg1[%c0, %c0_0] : memref<8x256xf32, #tpu.memory_space<vmem>>, vector<8x256xf32>
    %1 = arith.truncf %0 : vector<8x256xf32> to vector<8x256xbf16>
    %c0_1 = arith.constant 0 : index
    %c0_2 = arith.constant 0 : index
    %2 = vector.load %arg3[%c0_1, %c0_2] : memref<256x512xbf16, #tpu.memory_space<vmem>>, vector<256x512xbf16>
    %cst = arith.constant dense<0.000000e+00> : vector<8x512xf32>
    %3 = tpu.matmul %1, %2, %cst {dimension_numbers = #tpu.dot_dimension_numbers<[1], [0], [0], [1], [0, 0, 1, 1], [], []>} : vector<8x256xbf16>, vector<256x512xbf16>, vector<8x512xf32> -> vector<8x512xf32>
    %c0_3 = arith.constant 0 : index
    %c0_4 = arith.constant 0 : index
    %4 = vector.load %arg4[%c0_3, %c0_4] : memref<1x512xf32, #tpu.memory_space<vmem>>, vector<1x512xf32>
    %5 = vector.broadcast %4 : vector<1x512xf32> to vector<8x512xf32>
    %6 = arith.addf %3, %5 : vector<8x512xf32>
    %cst_5 = arith.constant 0.000000e+00 : f32
    %7 = vector.broadcast %cst_5 : f32 to vector<8x512xf32>
    %8 = arith.maximumf %6, %7 : vector<8x512xf32>
    %9 = arith.truncf %8 : vector<8x512xf32> to vector<8x512xbf16>
    %c0_6 = arith.constant 0 : index
    %c0_7 = arith.constant 0 : index
    %10 = vector.load %arg5[%c0_6, %c0_7] : memref<512x16xbf16, #tpu.memory_space<vmem>>, vector<512x16xbf16>
    %cst_8 = arith.constant dense<0.000000e+00> : vector<8x16xf32>
    %11 = tpu.matmul %9, %10, %cst_8 {dimension_numbers = #tpu.dot_dimension_numbers<[1], [0], [0], [1], [0, 0, 1, 1], [], []>} : vector<8x512xbf16>, vector<512x16xbf16>, vector<8x16xf32> -> vector<8x16xf32>
    %c0_9 = arith.constant 0 : index
    %c0_10 = arith.constant 0 : index
    %12 = vector.load %arg6[%c0_9, %c0_10] : memref<1x16xf32, #tpu.memory_space<vmem>>, vector<1x16xf32>
    %13 = vector.broadcast %12 : vector<1x16xf32> to vector<8x16xf32>
    %14 = arith.addf %11, %13 : vector<8x16xf32>
    %c0_11 = arith.constant 0 : index
    %c0_12 = arith.constant 0 : index
    %15 = vector.load %arg12[%c0_11, %c0_12] : memref<8x16xf32, #tpu.memory_space<vmem>>, vector<8x16xf32>
    tpu.vector_store %arg12[%c0_11, %c0_12], %14 {strides = array<i32>} : memref<8x16xf32, #tpu.memory_space<vmem>>, vector<8x16xf32>,
    %16 = vector.extract_strided_slice %14 {offsets = [0, 0], sizes = [8, 8], strides = [1, 1]} : vector<8x16xf32> to vector<8x8xf32>
    %17 = vector.extract_strided_slice %14 {offsets = [0, 8], sizes = [8, 8], strides = [1, 1]} : vector<8x16xf32> to vector<8x8xf32>
    %c0_13 = arith.constant 0 : index
    %c0_14 = arith.constant 0 : index
    %18 = vector.load %arg2[%c0_13, %c0_14] : memref<8x8xf32, #tpu.memory_space<vmem>>, vector<8x8xf32>
    %cst_15 = arith.constant 5.000000e-01 : f32
    %19 = vector.broadcast %cst_15 : f32 to vector<8x8xf32>
    %20 = arith.mulf %19, %17 : vector<8x8xf32>
    %21 = math.exp %20 : vector<8x8xf32>
    %22 = arith.mulf %18, %21 : vector<8x8xf32>
    %23 = arith.addf %16, %22 : vector<8x8xf32>
    %24 = arith.truncf %23 : vector<8x8xf32> to vector<8x8xbf16>
    %c0_16 = arith.constant 0 : index
    %c0_17 = arith.constant 0 : index
    %25 = vector.load %arg7[%c0_16, %c0_17] : memref<8x512xbf16, #tpu.memory_space<vmem>>, vector<8x512xbf16>
    %cst_18 = arith.constant dense<0.000000e+00> : vector<8x512xf32>
    %26 = tpu.matmul %24, %25, %cst_18 {dimension_numbers = #tpu.dot_dimension_numbers<[1], [0], [0], [1], [0, 0, 1, 1], [], []>} : vector<8x8xbf16>, vector<8x512xbf16>, vector<8x512xf32> -> vector<8x512xf32>
    %c0_19 = arith.constant 0 : index
    %c0_20 = arith.constant 0 : index
    %27 = vector.load %arg8[%c0_19, %c0_20] : memref<1x512xf32, #tpu.memory_space<vmem>>, vector<1x512xf32>
    %28 = vector.broadcast %27 : vector<1x512xf32> to vector<8x512xf32>
    %29 = arith.addf %26, %28 : vector<8x512xf32>
    %cst_21 = arith.constant 0.000000e+00 : f32
    %30 = vector.broadcast %cst_21 : f32 to vector<8x512xf32>
    %31 = arith.maximumf %29, %30 : vector<8x512xf32>
    %32 = arith.truncf %31 : vector<8x512xf32> to vector<8x512xbf16>
    %c0_22 = arith.constant 0 : index
    %c0_23 = arith.constant 0 : index
    %33 = vector.load %arg9[%c0_22, %c0_23] : memref<512x256xbf16, #tpu.memory_space<vmem>>, vector<512x256xbf16>
    %cst_24 = arith.constant dense<0.000000e+00> : vector<8x256xf32>
    %34 = tpu.matmul %32, %33, %cst_24 {dimension_numbers = #tpu.dot_dimension_numbers<[1], [0], [0], [1], [0, 0, 1, 1], [], []>} : vector<8x512xbf16>, vector<512x256xbf16>, vector<8x256xf32> -> vector<8x256xf32>
    %c0_25 = arith.constant 0 : index
    %c0_26 = arith.constant 0 : index
    %35 = vector.load %arg10[%c0_25, %c0_26] : memref<1x256xf32, #tpu.memory_space<vmem>>, vector<1x256xf32>
    %36 = vector.broadcast %35 : vector<1x256xf32> to vector<8x256xf32>
    %37 = arith.addf %34, %36 : vector<8x256xf32>
    %38 = arith.negf %37 : vector<8x256xf32>
    %39 = math.exp %38 : vector<8x256xf32>
    %cst_27 = arith.constant 1.000000e+00 : f32
    %40 = vector.broadcast %cst_27 : f32 to vector<8x256xf32>
    %41 = arith.addf %40, %39 : vector<8x256xf32>
    %42 = arith.divf %40, %41 : vector<8x256xf32>
    %c0_28 = arith.constant 0 : index
    %c0_29 = arith.constant 0 : index
    %43 = vector.load %arg11[%c0_28, %c0_29] : memref<8x256xf32, #tpu.memory_space<vmem>>, vector<8x256xf32>
    tpu.vector_store %arg11[%c0_28, %c0_29], %42 {strides = array<i32>} : memref<8x256xf32, #tpu.memory_space<vmem>>, vector<8x256xf32>,
    return
  }
  func.func @transform_0(%arg0: i32) -> (i32, i32) {
    %c0_i32 = arith.constant 0 : i32
    %c0_i32_0 = arith.constant 0 : i32
    return %arg0, %c0_i32 : i32, i32
  }
  func.func @transform_1(%arg0: i32) -> (i32, i32) {
    %c0_i32 = arith.constant 0 : i32
    %c0_i32_0 = arith.constant 0 : i32
    return %arg0, %c0_i32 : i32, i32
  }
  func.func @transform_2(%arg0: i32) -> (i32, i32) {
    %c0_i32 = arith.constant 0 : i32
    %c0_i32_0 = arith.constant 0 : i32
    %c0_i32_1 = arith.constant 0 : i32
    return %c0_i32, %c0_i32_0 : i32, i32
  }
  func.func @transform_3(%arg0: i32) -> (i32, i32) {
    %c0_i32 = arith.constant 0 : i32
    %c0_i32_0 = arith.constant 0 : i32
    %c0_i32_1 = arith.constant 0 : i32
    return %c0_i32, %c0_i32_0 : i32, i32
  }
  func.func @transform_4(%arg0: i32) -> (i32, i32) {
    %c0_i32 = arith.constant 0 : i32
    %c0_i32_0 = arith.constant 0 : i32
    %c0_i32_1 = arith.constant 0 : i32
    return %c0_i32, %c0_i32_0 : i32, i32
  }
  func.func @transform_5(%arg0: i32) -> (i32, i32) {
    %c0_i32 = arith.constant 0 : i32
    %c0_i32_0 = arith.constant 0 : i32
    %c0_i32_1 = arith.constant 0 : i32
    return %c0_i32, %c0_i32_0 : i32, i32
  }
  func.func @transform_6(%arg0: i32) -> (i32, i32) {
    %c0_i32 = arith.constant 0 : i32
    %c0_i32_0 = arith.constant 0 : i32
    %c0_i32_1 = arith.constant 0 : i32
    return %c0_i32, %c0_i32_0 : i32, i32
  }
  func.func @transform_7(%arg0: i32) -> (i32, i32) {
    %c0_i32 = arith.constant 0 : i32
    %c0_i32_0 = arith.constant 0 : i32
    %c0_i32_1 = arith.constant 0 : i32
    return %c0_i32, %c0_i32_0 : i32, i32
  }
  func.func @transform_8(%arg0: i32) -> (i32, i32) {
    %c0_i32 = arith.constant 0 : i32
    %c0_i32_0 = arith.constant 0 : i32
    %c0_i32_1 = arith.constant 0 : i32
    return %c0_i32, %c0_i32_0 : i32, i32
  }
  func.func @transform_9(%arg0: i32) -> (i32, i32) {
    %c0_i32 = arith.constant 0 : i32
    %c0_i32_0 = arith.constant 0 : i32
    %c0_i32_1 = arith.constant 0 : i32
    return %c0_i32, %c0_i32_0 : i32, i32
  }
  func.func @transform_10(%arg0: i32) -> (i32, i32) {
    %c0_i32 = arith.constant 0 : i32
    %c0_i32_0 = arith.constant 0 : i32
    return %arg0, %c0_i32 : i32, i32
  }
  func.func @transform_11(%arg0: i32) -> (i32, i32) {
    %c0_i32 = arith.constant 0 : i32
    %c0_i32_0 = arith.constant 0 : i32
    return %arg0, %c0_i32 : i32, i32
  }
}

</mosaic_0001>

<llo_original>
// kernel: tpu_custom_call.1
$region0: #{tpu_custom_call.1}
  #allocation0 [shape = 'u32[]', space=smem, size = 0x4, offset = 0x4, fixed_abs, tag = 'smem constant byte address 0x4 - core index']
  #allocation1 [shape = 'u32[144,128]{1,0:T(1,128)}', space=vmem, size = 0x12000, scoped, tag = 'internal scratch']
  %s0 = inlined_call_operand.vmem [shape: f32[2,256], index: 0, kind: input, shape index: {}]
  %s1 = inlined_call_operand.vmem [shape: f32[2,8], index: 1, kind: input, shape index: {}]
  %s2 = inlined_call_operand.hbm [shape: bf16[256,512], index: 2, kind: input, shape index: {}]
  %s3 = inlined_call_operand.vmem [shape: f32[1,512], index: 3, kind: input, shape index: {}]
  %s4 = inlined_call_operand.vmem [shape: bf16[512,16], index: 4, kind: input, shape index: {}]
  %s5 = inlined_call_operand.vmem [shape: f32[1,16], index: 5, kind: input, shape index: {}]
  %s6 = inlined_call_operand.vmem [shape: bf16[8,512], index: 6, kind: input, shape index: {}]
  %s7 = inlined_call_operand.vmem [shape: f32[1,512], index: 7, kind: input, shape index: {}]
  %s8 = inlined_call_operand.hbm [shape: bf16[512,256], index: 8, kind: input, shape index: {}]
  %s9 = inlined_call_operand.vmem [shape: f32[1,256], index: 9, kind: input, shape index: {}]
  %s10 = inlined_call_operand.hbm [shape: f32[2,256], index: 10, kind: output, shape index: {0}]
  %s11 = inlined_call_operand.hbm [shape: f32[2,16], index: 11, kind: output, shape index: {1}]
  %12 = xla_tuple %s10, %s11
  %s13 = sld [smem:[#allocation0]]
  $region66: #{tpu_custom_call.1} parent=0
    _
  %s15 = ssub.s32 1, %s13
  %s16 = scalar_select 0, %s15, %s13
  $region1: #{tpu_custom_call.1} parent=0
    #allocation2 [shape = 'u8[262144]{0}', space=vmem, size = 0x40000, scoped, tag = 'input window, operand 2, single buffered']
    #allocation3 [shape = 's32[1]{0}', space=sflag, size = 0x4, scoped, tag = 'scoped memory for tpu_custom_call.1']
    #allocation4 [shape = 's32[1]{0}', space=sflag, size = 0x4, scoped, tag = 'scoped memory for tpu_custom_call.1']
    #allocation5 [shape = 'u8[262144]{0}', space=vmem, size = 0x40000, scoped, tag = 'input window, operand 8, single buffered']
    #allocation6 [shape = 's32[1]{0}', space=sflag, size = 0x4, scoped, tag = 'scoped memory for tpu_custom_call.1']
    #allocation7 [shape = 'u8[8192]{0}', space=vmem, size = 0x2000, scoped, tag = 'output window, operand 0, single buffered']
    #allocation8 [shape = 'u8[4096]{0}', space=vmem, size = 0x1000, scoped, tag = 'output window, operand 1, single buffered']
    #allocation9 [shape = 's32[1]{0}', space=sflag, size = 0x4, scoped, tag = 'scoped memory for tpu_custom_call.1']
    %17 = vsyncpa [#allocation3], 0
    %18 = vsyncpa [#allocation6], 0
    %19 = vsyncpa [#allocation4], 0
    %20 = vsyncpa [#allocation9], 0
    // Predicated region
    $region2: #{tpu_custom_call.1} parent=1 // pred_check
      _
    $region3: #{tpu_custom_call.1} parent=1 // pred_check_branch
      %22 = sbr.rel (0) target = $region5
    $region4: #{tpu_custom_call.1} parent=1 // pred_region
      _
    $region5: #{tpu_custom_call.1} parent=1 // pred_fallthru
      _
    // Predicated region
    $region6: #{tpu_custom_call.1} parent=1 // pred_check
      _
    $region7: #{tpu_custom_call.1} parent=1 // pred_check_branch
      %24 = sbr.rel (0) target = $region9
    $region8: #{tpu_custom_call.1} parent=1 // pred_region
      _
    $region9: #{tpu_custom_call.1} parent=1 // pred_fallthru
      _
    // Predicated region
    $region10: #{tpu_custom_call.1} parent=1 // pred_check
      _
    $region11: #{tpu_custom_call.1} parent=1 // pred_check_branch
      %26 = sbr.rel (0) target = $region13
    $region12: #{tpu_custom_call.1} parent=1 // pred_region
      %s28 = ssub.s32 8192, 8192
      %29 = vsyncadd [#allocation3], %s28
      %s30 = sshll.u32 [#allocation2], 4
      %s31 = int_to_ptr.vmem [resolvable:$true] %s30
      %36 = dma.hbm_to_vmem [thread:$0]  %s2, 8192, %s31, [#allocation3], 256, 256, 16
    $region13: #{tpu_custom_call.1} parent=1 // pred_fallthru
      _
    // Predicated region
    $region14: #{tpu_custom_call.1} parent=1 // pred_check
      _
    $region15: #{tpu_custom_call.1} parent=1 // pred_check_branch
      %38 = sbr.rel (0) target = $region17
    $region16: #{tpu_custom_call.1} parent=1 // pred_region
      _
    $region17: #{tpu_custom_call.1} parent=1 // pred_fallthru
      _
    // Predicated region
    $region18: #{tpu_custom_call.1} parent=1 // pred_check
      _
    $region19: #{tpu_custom_call.1} parent=1 // pred_check_branch
      %40 = sbr.rel (0) target = $region21
    $region20: #{tpu_custom_call.1} parent=1 // pred_region
      _
    $region21: #{tpu_custom_call.1} parent=1 // pred_fallthru
      _
    // Predicated region
    $region22: #{tpu_custom_call.1} parent=1 // pred_check
      _
    $region23: #{tpu_custom_call.1} parent=1 // pred_check_branch
      %42 = sbr.rel (0) target = $region25
    $region24: #{tpu_custom_call.1} parent=1 // pred_region
      _
    $region25: #{tpu_custom_call.1} parent=1 // pred_fallthru
      _
    // Predicated region
    $region26: #{tpu_custom_call.1} parent=1 // pred_check
      _
    $region27: #{tpu_custom_call.1} parent=1 // pred_check_branch
      %44 = sbr.rel (0) target = $region29
    $region28: #{tpu_custom_call.1} parent=1 // pred_region
      _
    $region29: #{tpu_custom_call.1} parent=1 // pred_fallthru
      _
    // Predicated region
    $region30: #{tpu_custom_call.1} parent=1 // pred_check
      _
    $region31: #{tpu_custom_call.1} parent=1 // pred_check_branch
      %46 = sbr.rel (0) target = $region33
    $region32: #{tpu_custom_call.1} parent=1 // pred_region
      _
    $region33: #{tpu_custom_call.1} parent=1 // pred_fallthru
      _
    // Predicated region
    $region34: #{tpu_custom_call.1} parent=1 // pred_check
      _
    $region35: #{tpu_custom_call.1} parent=1 // pred_check_branch
      %48 = sbr.rel (0) target = $region37
    $region36: #{tpu_custom_call.1} parent=1 // pred_region
      %s50 = ssub.s32 8192, 8192
      %51 = vsyncadd [#allocation6], %s50
      %s52 = sshll.u32 [#allocation5], 4
      %s53 = int_to_ptr.vmem [resolvable:$true] %s52
      %58 = dma.hbm_to_vmem [thread:$0]  %s8, 8192, %s53, [#allocation6], 128, 128, 8
    $region37: #{tpu_custom_call.1} parent=1 // pred_fallthru
      _
    // Predicated region
    $region38: #{tpu_custom_call.1} parent=1 // pred_check
      _
    $region39: #{tpu_custom_call.1} parent=1 // pred_check_branch
      %60 = sbr.rel (0) target = $region41
    $region40: #{tpu_custom_call.1} parent=1 // pred_region
      _
    $region41: #{tpu_custom_call.1} parent=1 // pred_fallthru
      _
    // Predicated region
    $region42: #{tpu_custom_call.1} parent=1 // pred_check
      _
    $region43: #{tpu_custom_call.1} parent=1 // pred_check_branch
      %62 = sbr.rel (0) target = $region45
    $region44: #{tpu_custom_call.1} parent=1 // pred_region
      %63 = dma.done [#allocation3], 8192
    $region45: #{tpu_custom_call.1} parent=1 // pred_fallthru
      _
    // Predicated region
    $region46: #{tpu_custom_call.1} parent=1 // pred_check
      _
    $region47: #{tpu_custom_call.1} parent=1 // pred_check_branch
      %65 = sbr.rel (0) target = $region49
    $region48: #{tpu_custom_call.1} parent=1 // pred_region
      %66 = dma.done [#allocation6], 8192
    $region49: #{tpu_custom_call.1} parent=1 // pred_fallthru
      _
    %v68 = vld [vmem:[%s0] sm:$0xf]
    %v69 = vld [vmem:[%s0 + $0x4] sm:$0xf]
    %v70 = vld [vmem:[%s0 + $0x8] sm:$0xf]
    %v71 = vld [vmem:[%s0 + $0xc] sm:$0xf]
    %v76 = vcombine.low %v68, %v69
    %v77 = vcombine.low %v70, %v71
    %v79 = vunpack.c.l.s4 1983009808
    %v80 = vunpack.c.0.s8 %v79
    %v81 = vlaneseq
    %v82 = vshrl.u32 %v81, 7
    %v83 = vsub.s32 %v80, %v82
    %v84 = vrot.slane %v76, %v83
    %v86 = vunpack.c.l.s4 1983009808
    %v87 = vunpack.c.0.s8 %v86
    %v88 = vlaneseq
    %v89 = vshrl.u32 %v88, 7
    %v90 = vsub.s32 %v87, %v89
    %v91 = vrot.slane %v77, %v90
    %v92 = vcombine.low %v84, %v91
    %v93 = vcombine.high %v84, %v91
    %v96 = vpack.c.bf16 %v92, %v92
    %v97 = vpack.c.bf16 %v93, %v93
    %v98 = vld [vmem:[#allocation2] sm:$0xff]
    %v99 = vld [vmem:[#allocation2 + $0x8] sm:$0xff]
    %v100 = vld [vmem:[#allocation2 + $0x10] sm:$0xff]
    %v101 = vld [vmem:[#allocation2 + $0x18] sm:$0xff]
    %v102 = vld [vmem:[#allocation2 + $0x20] sm:$0xff]
    %v103 = vld [vmem:[#allocation2 + $0x28] sm:$0xff]
    %v104 = vld [vmem:[#allocation2 + $0x30] sm:$0xff]
    %v105 = vld [vmem:[#allocation2 + $0x38] sm:$0xff]
    %v106 = vld [vmem:[#allocation2 + $0x40] sm:$0xff]
    %v107 = vld [vmem:[#allocation2 + $0x48] sm:$0xff]
    %v108 = vld [vmem:[#allocation2 + $0x50] sm:$0xff]
    %v109 = vld [vmem:[#allocation2 + $0x58] sm:$0xff]
    %v110 = vld [vmem:[#allocation2 + $0x60] sm:$0xff]
    %v111 = vld [vmem:[#allocation2 + $0x68] sm:$0xff]
    %v112 = vld [vmem:[#allocation2 + $0x70] sm:$0xff]
    %v113 = vld [vmem:[#allocation2 + $0x78] sm:$0xff]
    %v114 = vld [vmem:[#allocation2 + $0x80] sm:$0xff]
    %v115 = vld [vmem:[#allocation2 + $0x88] sm:$0xff]
    %v116 = vld [vmem:[#allocation2 + $0x90] sm:$0xff]
    %v117 = vld [vmem:[#allocation2 + $0x98] sm:$0xff]
    %v118 = vld [vmem:[#allocation2 + $0xa0] sm:$0xff]
    %v119 = vld [vmem:[#allocation2 + $0xa8] sm:$0xff]
    %v120 = vld [vmem:[#allocation2 + $0xb0] sm:$0xff]
    %v121 = vld [vmem:[#allocation2 + $0xb8] sm:$0xff]
    %v122 = vld [vmem:[#allocation2 + $0xc0] sm:$0xff]
    %v123 = vld [vmem:[#allocation2 + $0xc8] sm:$0xff]
    %v124 = vld [vmem:[#allocation2 + $0xd0] sm:$0xff]
    %v125 = vld [vmem:[#allocation2 + $0xd8] sm:$0xff]
    %v126 = vld [vmem:[#allocation2 + $0xe0] sm:$0xff]
    %v127 = vld [vmem:[#allocation2 + $0xe8] sm:$0xff]
    %v128 = vld [vmem:[#allocation2 + $0xf0] sm:$0xff]
    %v129 = vld [vmem:[#allocation2 + $0xf8] sm:$0xff]
    %v130 = vld [vmem:[#allocation2 + $0x100] sm:$0xff]
    %v131 = vld [vmem:[#allocation2 + $0x108] sm:$0xff]
    %v132 = vld [vmem:[#allocation2 + $0x110] sm:$0xff]
    %v133 = vld [vmem:[#allocation2 + $0x118] sm:$0xff]
    %v134 = vld [vmem:[#allocation2 + $0x120] sm:$0xff]
    %v135 = vld [vmem:[#allocation2 + $0x128] sm:$0xff]
    %v136 = vld [vmem:[#allocation2 + $0x130] sm:$0xff]
    %v137 = vld [vmem:[#allocation2 + $0x138] sm:$0xff]
    %v138 = vld [vmem:[#allocation2 + $0x140] sm:$0xff]
    %v139 = vld [vmem:[#allocation2 + $0x148] sm:$0xff]
    %v140 = vld [vmem:[#allocation2 + $0x150] sm:$0xff]
    %v141 = vld [vmem:[#allocation2 + $0x158] sm:$0xff]
    %v142 = vld [vmem:[#allocation2 + $0x160] sm:$0xff]
    %v143 = vld [vmem:[#allocation2 + $0x168] sm:$0xff]
    %v144 = vld [vmem:[#allocation2 + $0x170] sm:$0xff]
    %v145 = vld [vmem:[#allocation2 + $0x178] sm:$0xff]
    %v146 = vld [vmem:[#allocation2 + $0x180] sm:$0xff]
    %v147 = vld [vmem:[#allocation2 + $0x188] sm:$0xff]
    %v148 = vld [vmem:[#allocation2 + $0x190] sm:$0xff]
    %v149 = vld [vmem:[#allocation2 + $0x198] sm:$0xff]
    %v150 = vld [vmem:[#allocation2 + $0x1a0] sm:$0xff]
    %v151 = vld [vmem:[#allocation2 + $0x1a8] sm:$0xff]
    %v152 = vld [vmem:[#allocation2 + $0x1b0] sm:$0xff]
    %v153 = vld [vmem:[#allocation2 + $0x1b8] sm:$0xff]
    %v154 = vld [vmem:[#allocation2 + $0x1c0] sm:$0xff]
    %v155 = vld [vmem:[#allocation2 + $0x1c8] sm:$0xff]
    %v156 = vld [vmem:[#allocation2 + $0x1d0] sm:$0xff]
    %v157 = vld [vmem:[#allocation2 + $0x1d8] sm:$0xff]
    %v158 = vld [vmem:[#allocation2 + $0x1e0] sm:$0xff]
    %v159 = vld [vmem:[#allocation2 + $0x1e8] sm:$0xff]
    %v160 = vld [vmem:[#allocation2 + $0x1f0] sm:$0xff]
    %v161 = vld [vmem:[#allocation2 + $0x1f8] sm:$0xff]
    %v162 = vld [vmem:[%s3] sm:$0xf]
    %v164 = vlaneseq
    %v165 = vshrl.u32 %v164, 7
    %v166 = vsub.s32 0, %v165
    %v167 = vrot.slane %v162, %v166
    %v168 = vlaneseq
    %v169 = vshrl.u32 %v168, 7
    %v170 = vsub.s32 1, %v169
    %v171 = vrot.slane %v162, %v170
    %v172 = vlaneseq
    %v173 = vshrl.u32 %v172, 7
    %v174 = vsub.s32 2, %v173
    %v175 = vrot.slane %v162, %v174
    %v176 = vlaneseq
    %v177 = vshrl.u32 %v176, 7
    %v178 = vsub.s32 3, %v177
    %v179 = vrot.slane %v162, %v178
    %v248 = vunpack.c.l.b16 %v98
    %v249 = vunpack.c.h.b16 %v98
    %v250 = vunpack.c.l.b16 %v99
    %v251 = vunpack.c.h.b16 %v99
    %v252 = vunpack.c.l.b16 %v100
    %v253 = vunpack.c.h.b16 %v100
    %v254 = vunpack.c.l.b16 %v101
    %v255 = vunpack.c.h.b16 %v101
    %v256 = vunpack.c.l.b16 %v102
    %v257 = vunpack.c.h.b16 %v102
    %v258 = vunpack.c.l.b16 %v103
    %v259 = vunpack.c.h.b16 %v103
    %v260 = vunpack.c.l.b16 %v104
    %v261 = vunpack.c.h.b16 %v104
    %v262 = vunpack.c.l.b16 %v105
    %v263 = vunpack.c.h.b16 %v105
    %v264 = vunpack.c.l.b16 %v106
    %v265 = vunpack.c.h.b16 %v106
    %v266 = vunpack.c.l.b16 %v107
    %v267 = vunpack.c.h.b16 %v107
    %v268 = vunpack.c.l.b16 %v108
    %v269 = vunpack.c.h.b16 %v108
    %v270 = vunpack.c.l.b16 %v109
    %v271 = vunpack.c.h.b16 %v109
    %v272 = vunpack.c.l.b16 %v110
    %v273 = vunpack.c.h.b16 %v110
    %v274 = vunpack.c.l.b16 %v111
    %v275 = vunpack.c.h.b16 %v111
    %v276 = vunpack.c.l.b16 %v112
    %v277 = vunpack.c.h.b16 %v112
    %v278 = vunpack.c.l.b16 %v113
    %v279 = vunpack.c.h.b16 %v113
    %v280 = vunpack.c.l.b16 %v114
    %v281 = vunpack.c.h.b16 %v114
    %v282 = vunpack.c.l.b16 %v115
    %v283 = vunpack.c.h.b16 %v115
    %v284 = vunpack.c.l.b16 %v116
    %v285 = vunpack.c.h.b16 %v116
    %v286 = vunpack.c.l.b16 %v117
    %v287 = vunpack.c.h.b16 %v117
    %v288 = vunpack.c.l.b16 %v118
    %v289 = vunpack.c.h.b16 %v118
    %v290 = vunpack.c.l.b16 %v119
    %v291 = vunpack.c.h.b16 %v119
    %v292 = vunpack.c.l.b16 %v120
    %v293 = vunpack.c.h.b16 %v120
    %v294 = vunpack.c.l.b16 %v121
    %v295 = vunpack.c.h.b16 %v121
    %v296 = vunpack.c.l.b16 %v122
    %v297 = vunpack.c.h.b16 %v122
    %v298 = vunpack.c.l.b16 %v123
    %v299 = vunpack.c.h.b16 %v123
    %v300 = vunpack.c.l.b16 %v124
    %v301 = vunpack.c.h.b16 %v124
    %v302 = vunpack.c.l.b16 %v125
    %v303 = vunpack.c.h.b16 %v125
    %v304 = vunpack.c.l.b16 %v126
    %v305 = vunpack.c.h.b16 %v126
    %v306 = vunpack.c.l.b16 %v127
    %v307 = vunpack.c.h.b16 %v127
    %v308 = vunpack.c.l.b16 %v128
    %v309 = vunpack.c.h.b16 %v128
    %v310 = vunpack.c.l.b16 %v129
    %v311 = vunpack.c.h.b16 %v129
    %v312 = vunpack.c.l.b16 %v130
    %v313 = vunpack.c.h.b16 %v130
    %v314 = vunpack.c.l.b16 %v131
    %v315 = vunpack.c.h.b16 %v131
    %v316 = vunpack.c.l.b16 %v132
    %v317 = vunpack.c.h.b16 %v132
    %v318 = vunpack.c.l.b16 %v133
    %v319 = vunpack.c.h.b16 %v133
    %v320 = vunpack.c.l.b16 %v134
    %v321 = vunpack.c.h.b16 %v134
    %v322 = vunpack.c.l.b16 %v135
    %v323 = vunpack.c.h.b16 %v135
    %v324 = vunpack.c.l.b16 %v136
    %v325 = vunpack.c.h.b16 %v136
    %v326 = vunpack.c.l.b16 %v137
    %v327 = vunpack.c.h.b16 %v137
    %v328 = vunpack.c.l.b16 %v138
    %v329 = vunpack.c.h.b16 %v138
    %v330 = vunpack.c.l.b16 %v139
    %v331 = vunpack.c.h.b16 %v139
    %v332 = vunpack.c.l.b16 %v140
    %v333 = vunpack.c.h.b16 %v140
    %v334 = vunpack.c.l.b16 %v141
    %v335 = vunpack.c.h.b16 %v141
    %v336 = vunpack.c.l.b16 %v142
    %v337 = vunpack.c.h.b16 %v142
    %v338 = vunpack.c.l.b16 %v143
    %v339 = vunpack.c.h.b16 %v143
    %v340 = vunpack.c.l.b16 %v144
    %v341 = vunpack.c.h.b16 %v144
    %v342 = vunpack.c.l.b16 %v145
    %v343 = vunpack.c.h.b16 %v145
    %v344 = vunpack.c.l.b16 %v146
    %v345 = vunpack.c.h.b16 %v146
    %v346 = vunpack.c.l.b16 %v147
    %v347 = vunpack.c.h.b16 %v147
    %v348 = vunpack.c.l.b16 %v148
    %v349 = vunpack.c.h.b16 %v148
    %v350 = vunpack.c.l.b16 %v149
    %v351 = vunpack.c.h.b16 %v149
    %v352 = vunpack.c.l.b16 %v150
    %v353 = vunpack.c.h.b16 %v150
    %v354 = vunpack.c.l.b16 %v151
    %v355 = vunpack.c.h.b16 %v151
    %v356 = vunpack.c.l.b16 %v152
    %v357 = vunpack.c.h.b16 %v152
    %v358 = vunpack.c.l.b16 %v153
    %v359 = vunpack.c.h.b16 %v153
    %v360 = vunpack.c.l.b16 %v154
    %v361 = vunpack.c.h.b16 %v154
    %v362 = vunpack.c.l.b16 %v155
    %v363 = vunpack.c.h.b16 %v155
    %v364 = vunpack.c.l.b16 %v156
    %v365 = vunpack.c.h.b16 %v156
    %v366 = vunpack.c.l.b16 %v157
    %v367 = vunpack.c.h.b16 %v157
    %v368 = vunpack.c.l.b16 %v158
    %v369 = vunpack.c.h.b16 %v158
    %v370 = vunpack.c.l.b16 %v159
    %v371 = vunpack.c.h.b16 %v159
    %v372 = vunpack.c.l.b16 %v160
    %v373 = vunpack.c.h.b16 %v160
    %v374 = vunpack.c.l.b16 %v161
    %v375 = vunpack.c.h.b16 %v161
    %v376 = vpack.c.b16 %v252, %v248
    %v377 = vpack.c.b16 %v253, %v249
    %v378 = vpack.c.b16 %v254, %v250
    %v379 = vpack.c.b16 %v255, %v251
    %v380 = vpack.c.b16 %v260, %v256
    %v381 = vpack.c.b16 %v261, %v257
    %v382 = vpack.c.b16 %v262, %v258
    %v383 = vpack.c.b16 %v263, %v259
    %v384 = vpack.c.b16 %v268, %v264
    %v385 = vpack.c.b16 %v269, %v265
    %v386 = vpack.c.b16 %v270, %v266
    %v387 = vpack.c.b16 %v271, %v267
    %v388 = vpack.c.b16 %v276, %v272
    %v389 = vpack.c.b16 %v277, %v273
    %v390 = vpack.c.b16 %v278, %v274
    %v391 = vpack.c.b16 %v279, %v275
    %v392 = vpack.c.b16 %v284, %v280
    %v393 = vpack.c.b16 %v285, %v281
    %v394 = vpack.c.b16 %v286, %v282
    %v395 = vpack.c.b16 %v287, %v283
    %v396 = vpack.c.b16 %v292, %v288
    %v397 = vpack.c.b16 %v293, %v289
    %v398 = vpack.c.b16 %v294, %v290
    %v399 = vpack.c.b16 %v295, %v291
    %v400 = vpack.c.b16 %v300, %v296
    %v401 = vpack.c.b16 %v301, %v297
    %v402 = vpack.c.b16 %v302, %v298
    %v403 = vpack.c.b16 %v303, %v299
    %v404 = vpack.c.b16 %v308, %v304
    %v405 = vpack.c.b16 %v309, %v305
    %v406 = vpack.c.b16 %v310, %v306
    %v407 = vpack.c.b16 %v311, %v307
    %v408 = vpack.c.b16 %v316, %v312
    %v409 = vpack.c.b16 %v317, %v313
    %v410 = vpack.c.b16 %v318, %v314
    %v411 = vpack.c.b16 %v319, %v315
    %v412 = vpack.c.b16 %v324, %v320
    %v413 = vpack.c.b16 %v325, %v321
    %v414 = vpack.c.b16 %v326, %v322
    %v415 = vpack.c.b16 %v327, %v323
    %v416 = vpack.c.b16 %v332, %v328
    %v417 = vpack.c.b16 %v333, %v329
    %v418 = vpack.c.b16 %v334, %v330
    %v419 = vpack.c.b16 %v335, %v331
    %v420 = vpack.c.b16 %v340, %v336
    %v421 = vpack.c.b16 %v341, %v337
    %v422 = vpack.c.b16 %v342, %v338
    %v423 = vpack.c.b16 %v343, %v339
    %v424 = vpack.c.b16 %v348, %v344
    %v425 = vpack.c.b16 %v349, %v345
    %v426 = vpack.c.b16 %v350, %v346
    %v427 = vpack.c.b16 %v351, %v347
    %v428 = vpack.c.b16 %v356, %v352
    %v429 = vpack.c.b16 %v357, %v353
    %v430 = vpack.c.b16 %v358, %v354
    %v431 = vpack.c.b16 %v359, %v355
    %v432 = vpack.c.b16 %v364, %v360
    %v433 = vpack.c.b16 %v365, %v361
    %v434 = vpack.c.b16 %v366, %v362
    %v435 = vpack.c.b16 %v367, %v363
    %v436 = vpack.c.b16 %v372, %v368
    %v437 = vpack.c.b16 %v373, %v369
    %v438 = vpack.c.b16 %v374, %v370
    %v439 = vpack.c.b16 %v375, %v371
    %504 = vmatprep.subr.bf16.mxu0 %v377
    %505 = vmatpush1.bf16.msra.mxu0 %v376
    %506 = vmatprep.subr.bf16.mxu0 %v381
    %507 = vmatpush1.bf16.msra.mxu0 %v380
    %508 = vmatprep.subr.bf16.mxu0 %v385
    %509 = vmatpush1.bf16.msra.mxu0 %v384
    %510 = vmatprep.subr.bf16.mxu0 %v389
    %511 = vmatpush1.bf16.msra.mxu0 %v388
    %512 = vmatprep.subr.bf16.mxu0 %v393
    %513 = vmatpush1.bf16.msra.mxu0 %v392
    %514 = vmatprep.subr.bf16.mxu0 %v397
    %515 = vmatpush1.bf16.msra.mxu0 %v396
    %516 = vmatprep.subr.bf16.mxu0 %v401
    %517 = vmatpush1.bf16.msra.mxu0 %v400
    %518 = vmatprep.subr.bf16.mxu0 %v405
    %519 = vmatpush1.bf16.msra.mxu0 %v404
    %520 = vmatprep.subr.bf16.mxu0 %v409
    %521 = vmatpush1.bf16.msra.mxu0 %v408
    %522 = vmatprep.subr.bf16.mxu0 %v413
    %523 = vmatpush1.bf16.msra.mxu0 %v412
    %524 = vmatprep.subr.bf16.mxu0 %v417
    %525 = vmatpush1.bf16.msra.mxu0 %v416
    %526 = vmatprep.subr.bf16.mxu0 %v421
    %527 = vmatpush1.bf16.msra.mxu0 %v420
    %528 = vmatprep.subr.bf16.mxu0 %v425
    %529 = vmatpush1.bf16.msra.mxu0 %v424
    %530 = vmatprep.subr.bf16.mxu0 %v429
    %531 = vmatpush1.bf16.msra.mxu0 %v428
    %532 = vmatprep.subr.bf16.mxu0 %v433
    %533 = vmatpush1.bf16.msra.mxu0 %v432
    %534 = vmatprep.subr.bf16.mxu0 %v437
    %535 = vmatpush1.bf16.msra.mxu0 %v436
    %536 = vmatprep.mubr.bf16.mxu0 %v97
    %537 = vmatmul.mubr.bf16.gmra.mrb[0].mxu0 %v96
    %v538 = vpop.f32.mrb[0].mxu0
    %v539 = vadd.f32 %v167, %v538
    %v540 = vpop.f32.mrb[0].mxu0
    %v541 = vadd.f32 %v171, %v540
    %v542 = vpop.f32.mrb[0].mxu0
    %v543 = vpop.f32.mrb[0].mxu0
    %544 = vdwg.mxu0
    %545 = vmatprep.subr.bf16.mxu0 %v379
    %546 = vmatpush1.bf16.msra.mxu0 %v378
    %547 = vmatprep.subr.bf16.mxu0 %v383
    %548 = vmatpush1.bf16.msra.mxu0 %v382
    %549 = vmatprep.subr.bf16.mxu0 %v387
    %550 = vmatpush1.bf16.msra.mxu0 %v386
    %551 = vmatprep.subr.bf16.mxu0 %v391
    %552 = vmatpush1.bf16.msra.mxu0 %v390
    %553 = vmatprep.subr.bf16.mxu0 %v395
    %554 = vmatpush1.bf16.msra.mxu0 %v394
    %555 = vmatprep.subr.bf16.mxu0 %v399
    %556 = vmatpush1.bf16.msra.mxu0 %v398
    %557 = vmatprep.subr.bf16.mxu0 %v403
    %558 = vmatpush1.bf16.msra.mxu0 %v402
    %559 = vmatprep.subr.bf16.mxu0 %v407
    %560 = vmatpush1.bf16.msra.mxu0 %v406
    %561 = vmatprep.subr.bf16.mxu0 %v411
    %562 = vmatpush1.bf16.msra.mxu0 %v410
    %563 = vmatprep.subr.bf16.mxu0 %v415
    %564 = vmatpush1.bf16.msra.mxu0 %v414
    %565 = vmatprep.subr.bf16.mxu0 %v419
    %566 = vmatpush1.bf16.msra.mxu0 %v418
    %567 = vmatprep.subr.bf16.mxu0 %v423
    %568 = vmatpush1.bf16.msra.mxu0 %v422
    %569 = vmatprep.subr.bf16.mxu0 %v427
    %570 = vmatpush1.bf16.msra.mxu0 %v426
    %571 = vmatprep.subr.bf16.mxu0 %v431
    %572 = vmatpush1.bf16.msra.mxu0 %v430
    %573 = vmatprep.subr.bf16.mxu0 %v435
    %574 = vmatpush1.bf16.msra.mxu0 %v434
    %575 = vmatprep.subr.bf16.mxu0 %v439
    %576 = vmatpush1.bf16.msra.mxu0 %v438
    %577 = vmatprep.mubr.bf16.mxu0 %v97
    %578 = vmatmul.mubr.bf16.gmra.mrb[0].mxu0 %v96
    %v579 = vpop.f32.mrb[0].mxu0
    %v580 = vadd.f32 %v175, %v579
    %v581 = vpop.f32.mrb[0].mxu0
    %v582 = vadd.f32 %v179, %v581
    %v583 = vpop.f32.mrb[0].mxu0
    %v584 = vpop.f32.mrb[0].mxu0
    %585 = vdwg.mxu0
    %v586 = vmax.f32 %v539, 0.0
    %v587 = vmax.f32 %v541, 0.0
    %v588 = vmax.f32 %v580, 0.0
    %v589 = vmax.f32 %v582, 0.0
    %v590 = vpack.c.bf16 %v586, %v586
    %v591 = vpack.c.bf16 %v587, %v587
    %v592 = vpack.c.bf16 %v588, %v588
    %v593 = vpack.c.bf16 %v589, %v589
    %v594 = vld [vmem:[%s4] sm:$0xf]
    %v595 = vld [vmem:[%s4 + $0x4] sm:$0xf]
    %v596 = vld [vmem:[%s4 + $0x8] sm:$0xf]
    %v597 = vld [vmem:[%s4 + $0xc] sm:$0xf]
    %v598 = vld [vmem:[%s4 + $0x10] sm:$0xf]
    %v599 = vld [vmem:[%s4 + $0x14] sm:$0xf]
    %v600 = vld [vmem:[%s4 + $0x18] sm:$0xf]
    %v601 = vld [vmem:[%s4 + $0x1c] sm:$0xf]
    %v602 = vld [vmem:[%s4 + $0x20] sm:$0xf]
    %v603 = vld [vmem:[%s4 + $0x24] sm:$0xf]
    %v604 = vld [vmem:[%s4 + $0x28] sm:$0xf]
    %v605 = vld [vmem:[%s4 + $0x2c] sm:$0xf]
    %v606 = vld [vmem:[%s4 + $0x30] sm:$0xf]
    %v607 = vld [vmem:[%s4 + $0x34] sm:$0xf]
    %v608 = vld [vmem:[%s4 + $0x38] sm:$0xf]
    %v609 = vld [vmem:[%s4 + $0x3c] sm:$0xf]
    %v610 = vld [vmem:[%s4 + $0x40] sm:$0xf]
    %v611 = vld [vmem:[%s4 + $0x44] sm:$0xf]
    %v612 = vld [vmem:[%s4 + $0x48] sm:$0xf]
    %v613 = vld [vmem:[%s4 + $0x4c] sm:$0xf]
    %v614 = vld [vmem:[%s4 + $0x50] sm:$0xf]
    %v615 = vld [vmem:[%s4 + $0x54] sm:$0xf]
    %v616 = vld [vmem:[%s4 + $0x58] sm:$0xf]
    %v617 = vld [vmem:[%s4 + $0x5c] sm:$0xf]
    %v618 = vld [vmem:[%s4 + $0x60] sm:$0xf]
    %v619 = vld [vmem:[%s4 + $0x64] sm:$0xf]
    %v620 = vld [vmem:[%s4 + $0x68] sm:$0xf]
    %v621 = vld [vmem:[%s4 + $0x6c] sm:$0xf]
    %v622 = vld [vmem:[%s4 + $0x70] sm:$0xf]
    %v623 = vld [vmem:[%s4 + $0x74] sm:$0xf]
    %v624 = vld [vmem:[%s4 + $0x78] sm:$0xf]
    %v625 = vld [vmem:[%s4 + $0x7c] sm:$0xf]
    %v626 = vld [vmem:[%s4 + $0x80] sm:$0xf]
    %v627 = vld [vmem:[%s4 + $0x84] sm:$0xf]
    %v628 = vld [vmem:[%s4 + $0x88] sm:$0xf]
    %v629 = vld [vmem:[%s4 + $0x8c] sm:$0xf]
    %v630 = vld [vmem:[%s4 + $0x90] sm:$0xf]
    %v631 = vld [vmem:[%s4 + $0x94] sm:$0xf]
    %v632 = vld [vmem:[%s4 + $0x98] sm:$0xf]
    %v633 = vld [vmem:[%s4 + $0x9c] sm:$0xf]
    %v634 = vld [vmem:[%s4 + $0xa0] sm:$0xf]
    %v635 = vld [vmem:[%s4 + $0xa4] sm:$0xf]
    %v636 = vld [vmem:[%s4 + $0xa8] sm:$0xf]
    %v637 = vld [vmem:[%s4 + $0xac] sm:$0xf]
    %v638 = vld [vmem:[%s4 + $0xb0] sm:$0xf]
    %v639 = vld [vmem:[%s4 + $0xb4] sm:$0xf]
    %v640 = vld [vmem:[%s4 + $0xb8] sm:$0xf]
    %v641 = vld [vmem:[%s4 + $0xbc] sm:$0xf]
    %v642 = vld [vmem:[%s4 + $0xc0] sm:$0xf]
    %v643 = vld [vmem:[%s4 + $0xc4] sm:$0xf]
    %v644 = vld [vmem:[%s4 + $0xc8] sm:$0xf]
    %v645 = vld [vmem:[%s4 + $0xcc] sm:$0xf]
    %v646 = vld [vmem:[%s4 + $0xd0] sm:$0xf]
    %v647 = vld [vmem:[%s4 + $0xd4] sm:$0xf]
    %v648 = vld [vmem:[%s4 + $0xd8] sm:$0xf]
    %v649 = vld [vmem:[%s4 + $0xdc] sm:$0xf]
    %v650 = vld [vmem:[%s4 + $0xe0] sm:$0xf]
    %v651 = vld [vmem:[%s4 + $0xe4] sm:$0xf]
    %v652 = vld [vmem:[%s4 + $0xe8] sm:$0xf]
    %v653 = vld [vmem:[%s4 + $0xec] sm:$0xf]
    %v654 = vld [vmem:[%s4 + $0xf0] sm:$0xf]
    %v655 = vld [vmem:[%s4 + $0xf4] sm:$0xf]
    %v656 = vld [vmem:[%s4 + $0xf8] sm:$0xf]
    %v657 = vld [vmem:[%s4 + $0xfc] sm:$0xf]
    %v658 = vld [vmem:[%s5] sm:$0x1]
    %v660 = vlaneseq
    %v661 = vshrl.u32 %v660, 7
    %v662 = vsub.s32 0, %v661
    %v663 = vrot.slane %v658, %v662
    %v729 = vunpack.c.l.b16 %v594
    %v730 = vunpack.c.l.b16 %v595
    %v731 = vunpack.c.l.b16 %v596
    %v732 = vunpack.c.l.b16 %v597
    %v733 = vunpack.c.l.b16 %v598
    %v734 = vunpack.c.l.b16 %v599
    %v735 = vunpack.c.l.b16 %v600
    %v736 = vunpack.c.l.b16 %v601
    %v737 = vunpack.c.l.b16 %v602
    %v738 = vunpack.c.l.b16 %v603
    %v739 = vunpack.c.l.b16 %v604
    %v740 = vunpack.c.l.b16 %v605
    %v741 = vunpack.c.l.b16 %v606
    %v742 = vunpack.c.l.b16 %v607
    %v743 = vunpack.c.l.b16 %v608
    %v744 = vunpack.c.l.b16 %v609
    %v745 = vunpack.c.l.b16 %v610
    %v746 = vunpack.c.l.b16 %v611
    %v747 = vunpack.c.l.b16 %v612
    %v748 = vunpack.c.l.b16 %v613
    %v749 = vunpack.c.l.b16 %v614
    %v750 = vunpack.c.l.b16 %v615
    %v751 = vunpack.c.l.b16 %v616
    %v752 = vunpack.c.l.b16 %v617
    %v753 = vunpack.c.l.b16 %v618
    %v754 = vunpack.c.l.b16 %v619
    %v755 = vunpack.c.l.b16 %v620
    %v756 = vunpack.c.l.b16 %v621
    %v757 = vunpack.c.l.b16 %v622
    %v758 = vunpack.c.l.b16 %v623
    %v759 = vunpack.c.l.b16 %v624
    %v760 = vunpack.c.l.b16 %v625
    %v761 = vunpack.c.l.b16 %v626
    %v762 = vunpack.c.l.b16 %v627
    %v763 = vunpack.c.l.b16 %v628
    %v764 = vunpack.c.l.b16 %v629
    %v765 = vunpack.c.l.b16 %v630
    %v766 = vunpack.c.l.b16 %v631
    %v767 = vunpack.c.l.b16 %v632
    %v768 = vunpack.c.l.b16 %v633
    %v769 = vunpack.c.l.b16 %v634
    %v770 = vunpack.c.l.b16 %v635
    %v771 = vunpack.c.l.b16 %v636
    %v772 = vunpack.c.l.b16 %v637
    %v773 = vunpack.c.l.b16 %v638
    %v774 = vunpack.c.l.b16 %v639
    %v775 = vunpack.c.l.b16 %v640
    %v776 = vunpack.c.l.b16 %v641
    %v777 = vunpack.c.l.b16 %v642
    %v778 = vunpack.c.l.b16 %v643
    %v779 = vunpack.c.l.b16 %v644
    %v780 = vunpack.c.l.b16 %v645
    %v781 = vunpack.c.l.b16 %v646
    %v782 = vunpack.c.l.b16 %v647
    %v783 = vunpack.c.l.b16 %v648
    %v784 = vunpack.c.l.b16 %v649
    %v785 = vunpack.c.l.b16 %v650
    %v786 = vunpack.c.l.b16 %v651
    %v787 = vunpack.c.l.b16 %v652
    %v788 = vunpack.c.l.b16 %v653
    %v789 = vunpack.c.l.b16 %v654
    %v790 = vunpack.c.l.b16 %v655
    %v791 = vunpack.c.l.b16 %v656
    %v792 = vunpack.c.l.b16 %v657
    %v793 = vpack.c.b16 %v730, %v729
    %v794 = vpack.c.b16 %v732, %v731
    %v795 = vpack.c.b16 %v734, %v733
    %v796 = vpack.c.b16 %v736, %v735
    %v797 = vpack.c.b16 %v738, %v737
    %v798 = vpack.c.b16 %v740, %v739
    %v799 = vpack.c.b16 %v742, %v741
    %v800 = vpack.c.b16 %v744, %v743
    %v801 = vpack.c.b16 %v746, %v745
    %v802 = vpack.c.b16 %v748, %v747
    %v803 = vpack.c.b16 %v750, %v749
    %v804 = vpack.c.b16 %v752, %v751
    %v805 = vpack.c.b16 %v754, %v753
    %v806 = vpack.c.b16 %v756, %v755
    %v807 = vpack.c.b16 %v758, %v757
    %v808 = vpack.c.b16 %v760, %v759
    %v809 = vpack.c.b16 %v762, %v761
    %v810 = vpack.c.b16 %v764, %v763
    %v811 = vpack.c.b16 %v766, %v765
    %v812 = vpack.c.b16 %v768, %v767
    %v813 = vpack.c.b16 %v770, %v769
    %v814 = vpack.c.b16 %v772, %v771
    %v815 = vpack.c.b16 %v774, %v773
    %v816 = vpack.c.b16 %v776, %v775
    %v817 = vpack.c.b16 %v778, %v777
    %v818 = vpack.c.b16 %v780, %v779
    %v819 = vpack.c.b16 %v782, %v781
    %v820 = vpack.c.b16 %v784, %v783
    %v821 = vpack.c.b16 %v786, %v785
    %v822 = vpack.c.b16 %v788, %v787
    %v823 = vpack.c.b16 %v790, %v789
    %v824 = vpack.c.b16 %v792, %v791
    %857 = vmatprep.subr.bf16.mxu0 0
    %858 = vmatpush1.bf16.msra.mxu0 %v793
    %859 = vmatprep.subr.bf16.mxu0 0
    %860 = vmatpush1.bf16.msra.mxu0 %v794
    %861 = vmatprep.subr.bf16.mxu0 0
    %862 = vmatpush1.bf16.msra.mxu0 %v795
    %863 = vmatprep.subr.bf16.mxu0 0
    %864 = vmatpush1.bf16.msra.mxu0 %v796
    %865 = vmatprep.subr.bf16.mxu0 0
    %866 = vmatpush1.bf16.msra.mxu0 %v797
    %867 = vmatprep.subr.bf16.mxu0 0
    %868 = vmatpush1.bf16.msra.mxu0 %v798
    %869 = vmatprep.subr.bf16.mxu0 0
    %870 = vmatpush1.bf16.msra.mxu0 %v799
    %871 = vmatprep.subr.bf16.mxu0 0
    %872 = vmatpush1.bf16.msra.mxu0 %v800
    %873 = vmatprep.subr.bf16.mxu0 0
    %874 = vmatpush1.bf16.msra.mxu0 %v801
    %875 = vmatprep.subr.bf16.mxu0 0
    %876 = vmatpush1.bf16.msra.mxu0 %v802
    %877 = vmatprep.subr.bf16.mxu0 0
    %878 = vmatpush1.bf16.msra.mxu0 %v803
    %879 = vmatprep.subr.bf16.mxu0 0
    %880 = vmatpush1.bf16.msra.mxu0 %v804
    %881 = vmatprep.subr.bf16.mxu0 0
    %882 = vmatpush1.bf16.msra.mxu0 %v805
    %883 = vmatprep.subr.bf16.mxu0 0
    %884 = vmatpush1.bf16.msra.mxu0 %v806
    %885 = vmatprep.subr.bf16.mxu0 0
    %886 = vmatpush1.bf16.msra.mxu0 %v807
    %887 = vmatprep.subr.bf16.mxu0 0
    %888 = vmatpush1.bf16.msra.mxu0 %v808
    %889 = vmatprep.mubr.bf16.mxu0 %v591
    %890 = vmatmul.mubr.bf16.gmra.mrb[0].mxu0 %v590
    %v891 = vpop.f32.mrb[0].mxu0
    %v892 = vadd.f32 %v663, %v891
    %v893 = vpop.f32.mrb[0].mxu0
    %v894 = vpop.f32.mrb[0].mxu0
    %v895 = vpop.f32.mrb[0].mxu0
    %896 = vdwg.mxu0
    %897 = vmatprep.subr.bf16.mxu0 0
    %898 = vmatpush1.bf16.msra.mxu0 %v809
    %899 = vmatprep.subr.bf16.mxu0 0
    %900 = vmatpush1.bf16.msra.mxu0 %v810
    %901 = vmatprep.subr.bf16.mxu0 0
    %902 = vmatpush1.bf16.msra.mxu0 %v811
    %903 = vmatprep.subr.bf16.mxu0 0
    %904 = vmatpush1.bf16.msra.mxu0 %v812
    %905 = vmatprep.subr.bf16.mxu0 0
    %906 = vmatpush1.bf16.msra.mxu0 %v813
    %907 = vmatprep.subr.bf16.mxu0 0
    %908 = vmatpush1.bf16.msra.mxu0 %v814
    %909 = vmatprep.subr.bf16.mxu0 0
    %910 = vmatpush1.bf16.msra.mxu0 %v815
    %911 = vmatprep.subr.bf16.mxu0 0
    %912 = vmatpush1.bf16.msra.mxu0 %v816
    %913 = vmatprep.subr.bf16.mxu0 0
    %914 = vmatpush1.bf16.msra.mxu0 %v817
    %915 = vmatprep.subr.bf16.mxu0 0
    %916 = vmatpush1.bf16.msra.mxu0 %v818
    %917 = vmatprep.subr.bf16.mxu0 0
    %918 = vmatpush1.bf16.msra.mxu0 %v819
    %919 = vmatprep.subr.bf16.mxu0 0
    %920 = vmatpush1.bf16.msra.mxu0 %v820
    %921 = vmatprep.subr.bf16.mxu0 0
    %922 = vmatpush1.bf16.msra.mxu0 %v821
    %923 = vmatprep.subr.bf16.mxu0 0
    %924 = vmatpush1.bf16.msra.mxu0 %v822
    %925 = vmatprep.subr.bf16.mxu0 0
    %926 = vmatpush1.bf16.msra.mxu0 %v823
    %927 = vmatprep.subr.bf16.mxu0 0
    %928 = vmatpush1.bf16.msra.mxu0 %v824
    %929 = vmatprep.mubr.bf16.mxu0 %v593
    %930 = vmatmul.mubr.bf16.gmra.mrb[0].mxu0 %v592
    %v931 = vpop.f32.mrb[0].mxu0
    %v932 = vadd.f32 %v892, %v931
    %v933 = vpop.f32.mrb[0].mxu0
    %v934 = vpop.f32.mrb[0].mxu0
    %v935 = vpop.f32.mrb[0].mxu0
    %936 = vdwg.mxu0
    %vm937 = vcmask 130048
    %938 = vst.msk [vmem:[#allocation8] sm:$0xff] %vm937, %v932
    %v939 = vld [vmem:[%s1] sm:$0xff]
    %v940 = vmul.f32 %v932, 0.5
    %v941 = vmul.f32 %v940, 1.442695
    %v942 = vpow.pop %v941
    %944 = vrot.lane.b32.xlu0 %v942, 120
    %v945 = vpop.permute.xlu0 %944
    %v947 = vmul.f32 %v939, %v945
    %v948 = vadd.f32 %v932, %v947
    %v949 = vpack.c.bf16 %v948, %v948
    %v950 = vld [vmem:[%s6] sm:$0xff]
    %v951 = vld [vmem:[%s6 + $0x8] sm:$0xff]
    %v952 = vld [vmem:[%s7] sm:$0xf]
    %v954 = vlaneseq
    %v955 = vshrl.u32 %v954, 7
    %v956 = vsub.s32 0, %v955
    %v957 = vrot.slane %v952, %v956
    %v958 = vlaneseq
    %v959 = vshrl.u32 %v958, 7
    %v960 = vsub.s32 1, %v959
    %v961 = vrot.slane %v952, %v960
    %v962 = vlaneseq
    %v963 = vshrl.u32 %v962, 7
    %v964 = vsub.s32 2, %v963
    %v965 = vrot.slane %v952, %v964
    %v966 = vlaneseq
    %v967 = vshrl.u32 %v966, 7
    %v968 = vsub.s32 3, %v967
    %v969 = vrot.slane %v952, %v968
    %v976 = vunpack.c.l.b16 %v950
    %v977 = vunpack.c.h.b16 %v950
    %v978 = vunpack.c.l.b16 %v951
    %v979 = vunpack.c.h.b16 %v951
    %v980 = vpack.c.b16 %v976, %v976
    %v981 = vpack.c.b16 %v977, %v977
    %v982 = vpack.c.b16 %v978, %v978
    %v983 = vpack.c.b16 %v979, %v979
    %vm984 = vcmask 64512
    %v986 = vsel %vm984, %v949, 0
    %vm988 = vcmask 1043456
    %v990 = vsel %vm988, %v980, 0
    %v993 = vsel %vm988, %v981, 0
    %v996 = vsel %vm988, %v982, 0
    %v999 = vsel %vm988, %v983, 0
    %1001 = vmatprep.subr.bf16.mxu0 %v993
    %1002 = vmatpush1.bf16.msra.mxu0 %v990
    %1003 = vmatprep.subr.bf16.mxu0 0
    %1004 = vmatpush1.bf16.msra.mxu0 0
    %1005 = vmatprep.subr.bf16.mxu0 0
    %1006 = vmatpush1.bf16.msra.mxu0 0
    %1007 = vmatprep.subr.bf16.mxu0 0
    %1008 = vmatpush1.bf16.msra.mxu0 0
    %1009 = vmatprep.subr.bf16.mxu0 0
    %1010 = vmatpush1.bf16.msra.mxu0 0
    %1011 = vmatprep.subr.bf16.mxu0 0
    %1012 = vmatpush1.bf16.msra.mxu0 0
    %1013 = vmatprep.subr.bf16.mxu0 0
    %1014 = vmatpush1.bf16.msra.mxu0 0
    %1015 = vmatprep.subr.bf16.mxu0 0
    %1016 = vmatpush1.bf16.msra.mxu0 0
    %1017 = vmatprep.subr.bf16.mxu0 0
    %1018 = vmatpush1.bf16.msra.mxu0 0
    %1019 = vmatprep.subr.bf16.mxu0 0
    %1020 = vmatpush1.bf16.msra.mxu0 0
    %1021 = vmatprep.subr.bf16.mxu0 0
    %1022 = vmatpush1.bf16.msra.mxu0 0
    %1023 = vmatprep.subr.bf16.mxu0 0
    %1024 = vmatpush1.bf16.msra.mxu0 0
    %1025 = vmatprep.subr.bf16.mxu0 0
    %1026 = vmatpush1.bf16.msra.mxu0 0
    %1027 = vmatprep.subr.bf16.mxu0 0
    %1028 = vmatpush1.bf16.msra.mxu0 0
    %1029 = vmatprep.subr.bf16.mxu0 0
    %1030 = vmatpush1.bf16.msra.mxu0 0
    %1031 = vmatprep.subr.bf16.mxu0 0
    %1032 = vmatpush1.bf16.msra.mxu0 0
    %1033 = vmatprep.mubr.bf16.mxu0 0
    %1034 = vmatmul.mubr.bf16.gmra.mrb[0].mxu0 %v986
    %v1035 = vpop.f32.mrb[0].mxu0
    %v1036 = vadd.f32 %v957, %v1035
    %v1037 = vpop.f32.mrb[0].mxu0
    %v1038 = vadd.f32 %v961, %v1037
    %v1039 = vpop.f32.mrb[0].mxu0
    %v1040 = vpop.f32.mrb[0].mxu0
    %1041 = vdwg.mxu0
    %1042 = vmatprep.subr.bf16.mxu0 %v999
    %1043 = vmatpush1.bf16.msra.mxu0 %v996
    %1044 = vmatprep.subr.bf16.mxu0 0
    %1045 = vmatpush1.bf16.msra.mxu0 0
    %1046 = vmatprep.subr.bf16.mxu0 0
    %1047 = vmatpush1.bf16.msra.mxu0 0
    %1048 = vmatprep.subr.bf16.mxu0 0
    %1049 = vmatpush1.bf16.msra.mxu0 0
    %1050 = vmatprep.subr.bf16.mxu0 0
    %1051 = vmatpush1.bf16.msra.mxu0 0
    %1052 = vmatprep.subr.bf16.mxu0 0
    %1053 = vmatpush1.bf16.msra.mxu0 0
    %1054 = vmatprep.subr.bf16.mxu0 0
    %1055 = vmatpush1.bf16.msra.mxu0 0
    %1056 = vmatprep.subr.bf16.mxu0 0
    %1057 = vmatpush1.bf16.msra.mxu0 0
    %1058 = vmatprep.subr.bf16.mxu0 0
    %1059 = vmatpush1.bf16.msra.mxu0 0
    %1060 = vmatprep.subr.bf16.mxu0 0
    %1061 = vmatpush1.bf16.msra.mxu0 0
    %1062 = vmatprep.subr.bf16.mxu0 0
    %1063 = vmatpush1.bf16.msra.mxu0 0
    %1064 = vmatprep.subr.bf16.mxu0 0
    %1065 = vmatpush1.bf16.msra.mxu0 0
    %1066 = vmatprep.subr.bf16.mxu0 0
    %1067 = vmatpush1.bf16.msra.mxu0 0
    %1068 = vmatprep.subr.bf16.mxu0 0
    %1069 = vmatpush1.bf16.msra.mxu0 0
    %1070 = vmatprep.subr.bf16.mxu0 0
    %1071 = vmatpush1.bf16.msra.mxu0 0
    %1072 = vmatprep.subr.bf16.mxu0 0
    %1073 = vmatpush1.bf16.msra.mxu0 0
    %1074 = vmatprep.mubr.bf16.mxu0 0
    %1075 = vmatmul.mubr.bf16.gmra.mrb[0].mxu0 %v986
    %v1076 = vpop.f32.mrb[0].mxu0
    %v1077 = vadd.f32 %v965, %v1076
    %v1078 = vpop.f32.mrb[0].mxu0
    %v1079 = vadd.f32 %v969, %v1078
    %v1080 = vpop.f32.mrb[0].mxu0
    %v1081 = vpop.f32.mrb[0].mxu0
    %1082 = vdwg.mxu0
    %v1083 = vmax.f32 %v1036, 0.0
    %v1084 = vmax.f32 %v1038, 0.0
    %v1085 = vmax.f32 %v1077, 0.0
    %v1086 = vmax.f32 %v1079, 0.0
    %v1087 = vpack.c.bf16 %v1083, %v1083
    %v1088 = vpack.c.bf16 %v1084, %v1084
    %v1089 = vpack.c.bf16 %v1085, %v1085
    %v1090 = vpack.c.bf16 %v1086, %v1086
    %v1091 = vld [vmem:[#allocation5] sm:$0xff]
    %v1092 = vld [vmem:[#allocation5 + $0x8] sm:$0xff]
    %v1093 = vld [vmem:[#allocation5 + $0x10] sm:$0xff]
    %v1094 = vld [vmem:[#allocation5 + $0x18] sm:$0xff]
    %v1095 = vld [vmem:[#allocation5 + $0x20] sm:$0xff]
    %v1096 = vld [vmem:[#allocation5 + $0x28] sm:$0xff]
    %v1097 = vld [vmem:[#allocation5 + $0x30] sm:$0xff]
    %v1098 = vld [vmem:[#allocation5 + $0x38] sm:$0xff]
    %v1099 = vld [vmem:[#allocation5 + $0x40] sm:$0xff]
    %v1100 = vld [vmem:[#allocation5 + $0x48] sm:$0xff]
    %v1101 = vld [vmem:[#allocation5 + $0x50] sm:$0xff]
    %v1102 = vld [vmem:[#allocation5 + $0x58] sm:$0xff]
    %v1103 = vld [vmem:[#allocation5 + $0x60] sm:$0xff]
    %v1104 = vld [vmem:[#allocation5 + $0x68] sm:$0xff]
    %v1105 = vld [vmem:[#allocation5 + $0x70] sm:$0xff]
    %v1106 = vld [vmem:[#allocation5 + $0x78] sm:$0xff]
    %v1107 = vld [vmem:[#allocation5 + $0x80] sm:$0xff]
    %v1108 = vld [vmem:[#allocation5 + $0x88] sm:$0xff]
    %v1109 = vld [vmem:[#allocation5 + $0x90] sm:$0xff]
    %v1110 = vld [vmem:[#allocation5 + $0x98] sm:$0xff]
    %v1111 = vld [vmem:[#allocation5 + $0xa0] sm:$0xff]
    %v1112 = vld [vmem:[#allocation5 + $0xa8] sm:$0xff]
    %v1113 = vld [vmem:[#allocation5 + $0xb0] sm:$0xff]
    %v1114 = vld [vmem:[#allocation5 + $0xb8] sm:$0xff]
    %v1115 = vld [vmem:[#allocation5 + $0xc0] sm:$0xff]
    %v1116 = vld [vmem:[#allocation5 + $0xc8] sm:$0xff]
    %v1117 = vld [vmem:[#allocation5 + $0xd0] sm:$0xff]
    %v1118 = vld [vmem:[#allocation5 + $0xd8] sm:$0xff]
    %v1119 = vld [vmem:[#allocation5 + $0xe0] sm:$0xff]
    %v1120 = vld [vmem:[#allocation5 + $0xe8] sm:$0xff]
    %v1121 = vld [vmem:[#allocation5 + $0xf0] sm:$0xff]
    %v1122 = vld [vmem:[#allocation5 + $0xf8] sm:$0xff]
    %v1123 = vld [vmem:[#allocation5 + $0x100] sm:$0xff]
    %v1124 = vld [vmem:[#allocation5 + $0x108] sm:$0xff]
    %v1125 = vld [vmem:[#allocation5 + $0x110] sm:$0xff]
    %v1126 = vld [vmem:[#allocation5 + $0x118] sm:$0xff]
    %v1127 = vld [vmem:[#allocation5 + $0x120] sm:$0xff]
    %v1128 = vld [vmem:[#allocation5 + $0x128] sm:$0xff]
    %v1129 = vld [vmem:[#allocation5 + $0x130] sm:$0xff]
    %v1130 = vld [vmem:[#allocation5 + $0x138] sm:$0xff]
    %v1131 = vld [vmem:[#allocation5 + $0x140] sm:$0xff]
    %v1132 = vld [vmem:[#allocation5 + $0x148] sm:$0xff]
    %v1133 = vld [vmem:[#allocation5 + $0x150] sm:$0xff]
    %v1134 = vld [vmem:[#allocation5 + $0x158] sm:$0xff]
    %v1135 = vld [vmem:[#allocation5 + $0x160] sm:$0xff]
    %v1136 = vld [vmem:[#allocation5 + $0x168] sm:$0xff]
    %v1137 = vld [vmem:[#allocation5 + $0x170] sm:$0xff]
    %v1138 = vld [vmem:[#allocation5 + $0x178] sm:$0xff]
    %v1139 = vld [vmem:[#allocation5 + $0x180] sm:$0xff]
    %v1140 = vld [vmem:[#allocation5 + $0x188] sm:$0xff]
    %v1141 = vld [vmem:[#allocation5 + $0x190] sm:$0xff]
    %v1142 = vld [vmem:[#allocation5 + $0x198] sm:$0xff]
    %v1143 = vld [vmem:[#allocation5 + $0x1a0] sm:$0xff]
    %v1144 = vld [vmem:[#allocation5 + $0x1a8] sm:$0xff]
    %v1145 = vld [vmem:[#allocation5 + $0x1b0] sm:$0xff]
    %v1146 = vld [vmem:[#allocation5 + $0x1b8] sm:$0xff]
    %v1147 = vld [vmem:[#allocation5 + $0x1c0] sm:$0xff]
    %v1148 = vld [vmem:[#allocation5 + $0x1c8] sm:$0xff]
    %v1149 = vld [vmem:[#allocation5 + $0x1d0] sm:$0xff]
    %v1150 = vld [vmem:[#allocation5 + $0x1d8] sm:$0xff]
    %v1151 = vld [vmem:[#allocation5 + $0x1e0] sm:$0xff]
    %v1152 = vld [vmem:[#allocation5 + $0x1e8] sm:$0xff]
    %v1153 = vld [vmem:[#allocation5 + $0x1f0] sm:$0xff]
    %v1154 = vld [vmem:[#allocation5 + $0x1f8] sm:$0xff]
    %v1155 = vld [vmem:[%s9] sm:$0x3]
    %v1157 = vlaneseq
    %v1158 = vshrl.u32 %v1157, 7
    %v1159 = vsub.s32 0, %v1158
    %v1160 = vrot.slane %v1155, %v1159
    %v1161 = vlaneseq
    %v1162 = vshrl.u32 %v1161, 7
    %v1163 = vsub.s32 1, %v1162
    %v1164 = vrot.slane %v1155, %v1163
    %v1231 = vunpack.c.l.b16 %v1091
    %v1232 = vunpack.c.h.b16 %v1091
    %v1233 = vunpack.c.l.b16 %v1092
    %v1234 = vunpack.c.h.b16 %v1092
    %v1235 = vunpack.c.l.b16 %v1093
    %v1236 = vunpack.c.h.b16 %v1093
    %v1237 = vunpack.c.l.b16 %v1094
    %v1238 = vunpack.c.h.b16 %v1094
    %v1239 = vunpack.c.l.b16 %v1095
    %v1240 = vunpack.c.h.b16 %v1095
    %v1241 = vunpack.c.l.b16 %v1096
    %v1242 = vunpack.c.h.b16 %v1096
    %v1243 = vunpack.c.l.b16 %v1097
    %v1244 = vunpack.c.h.b16 %v1097
    %v1245 = vunpack.c.l.b16 %v1098
    %v1246 = vunpack.c.h.b16 %v1098
    %v1247 = vunpack.c.l.b16 %v1099
    %v1248 = vunpack.c.h.b16 %v1099
    %v1249 = vunpack.c.l.b16 %v1100
    %v1250 = vunpack.c.h.b16 %v1100
    %v1251 = vunpack.c.l.b16 %v1101
    %v1252 = vunpack.c.h.b16 %v1101
    %v1253 = vunpack.c.l.b16 %v1102
    %v1254 = vunpack.c.h.b16 %v1102
    %v1255 = vunpack.c.l.b16 %v1103
    %v1256 = vunpack.c.h.b16 %v1103
    %v1257 = vunpack.c.l.b16 %v1104
    %v1258 = vunpack.c.h.b16 %v1104
    %v1259 = vunpack.c.l.b16 %v1105
    %v1260 = vunpack.c.h.b16 %v1105
    %v1261 = vunpack.c.l.b16 %v1106
    %v1262 = vunpack.c.h.b16 %v1106
    %v1263 = vunpack.c.l.b16 %v1107
    %v1264 = vunpack.c.h.b16 %v1107
    %v1265 = vunpack.c.l.b16 %v1108
    %v1266 = vunpack.c.h.b16 %v1108
    %v1267 = vunpack.c.l.b16 %v1109
    %v1268 = vunpack.c.h.b16 %v1109
    %v1269 = vunpack.c.l.b16 %v1110
    %v1270 = vunpack.c.h.b16 %v1110
    %v1271 = vunpack.c.l.b16 %v1111
    %v1272 = vunpack.c.h.b16 %v1111
    %v1273 = vunpack.c.l.b16 %v1112
    %v1274 = vunpack.c.h.b16 %v1112
    %v1275 = vunpack.c.l.b16 %v1113
    %v1276 = vunpack.c.h.b16 %v1113
    %v1277 = vunpack.c.l.b16 %v1114
    %v1278 = vunpack.c.h.b16 %v1114
    %v1279 = vunpack.c.l.b16 %v1115
    %v1280 = vunpack.c.h.b16 %v1115
    %v1281 = vunpack.c.l.b16 %v1116
    %v1282 = vunpack.c.h.b16 %v1116
    %v1283 = vunpack.c.l.b16 %v1117
    %v1284 = vunpack.c.h.b16 %v1117
    %v1285 = vunpack.c.l.b16 %v1118
    %v1286 = vunpack.c.h.b16 %v1118
    %v1287 = vunpack.c.l.b16 %v1119
    %v1288 = vunpack.c.h.b16 %v1119
    %v1289 = vunpack.c.l.b16 %v1120
    %v1290 = vunpack.c.h.b16 %v1120
    %v1291 = vunpack.c.l.b16 %v1121
    %v1292 = vunpack.c.h.b16 %v1121
    %v1293 = vunpack.c.l.b16 %v1122
    %v1294 = vunpack.c.h.b16 %v1122
    %v1295 = vunpack.c.l.b16 %v1123
    %v1296 = vunpack.c.h.b16 %v1123
    %v1297 = vunpack.c.l.b16 %v1124
    %v1298 = vunpack.c.h.b16 %v1124
    %v1299 = vunpack.c.l.b16 %v1125
    %v1300 = vunpack.c.h.b16 %v1125
    %v1301 = vunpack.c.l.b16 %v1126
    %v1302 = vunpack.c.h.b16 %v1126
    %v1303 = vunpack.c.l.b16 %v1127
    %v1304 = vunpack.c.h.b16 %v1127
    %v1305 = vunpack.c.l.b16 %v1128
    %v1306 = vunpack.c.h.b16 %v1128
    %v1307 = vunpack.c.l.b16 %v1129
    %v1308 = vunpack.c.h.b16 %v1129
    %v1309 = vunpack.c.l.b16 %v1130
    %v1310 = vunpack.c.h.b16 %v1130
    %v1311 = vunpack.c.l.b16 %v1131
    %v1312 = vunpack.c.h.b16 %v1131
    %v1313 = vunpack.c.l.b16 %v1132
    %v1314 = vunpack.c.h.b16 %v1132
    %v1315 = vunpack.c.l.b16 %v1133
    %v1316 = vunpack.c.h.b16 %v1133
    %v1317 = vunpack.c.l.b16 %v1134
    %v1318 = vunpack.c.h.b16 %v1134
    %v1319 = vunpack.c.l.b16 %v1135
    %v1320 = vunpack.c.h.b16 %v1135
    %v1321 = vunpack.c.l.b16 %v1136
    %v1322 = vunpack.c.h.b16 %v1136
    %v1323 = vunpack.c.l.b16 %v1137
    %v1324 = vunpack.c.h.b16 %v1137
    %v1325 = vunpack.c.l.b16 %v1138
    %v1326 = vunpack.c.h.b16 %v1138
    %v1327 = vunpack.c.l.b16 %v1139
    %v1328 = vunpack.c.h.b16 %v1139
    %v1329 = vunpack.c.l.b16 %v1140
    %v1330 = vunpack.c.h.b16 %v1140
    %v1331 = vunpack.c.l.b16 %v1141
    %v1332 = vunpack.c.h.b16 %v1141
    %v1333 = vunpack.c.l.b16 %v1142
    %v1334 = vunpack.c.h.b16 %v1142
    %v1335 = vunpack.c.l.b16 %v1143
    %v1336 = vunpack.c.h.b16 %v1143
    %v1337 = vunpack.c.l.b16 %v1144
    %v1338 = vunpack.c.h.b16 %v1144
    %v1339 = vunpack.c.l.b16 %v1145
    %v1340 = vunpack.c.h.b16 %v1145
    %v1341 = vunpack.c.l.b16 %v1146
    %v1342 = vunpack.c.h.b16 %v1146
    %v1343 = vunpack.c.l.b16 %v1147
    %v1344 = vunpack.c.h.b16 %v1147
    %v1345 = vunpack.c.l.b16 %v1148
    %v1346 = vunpack.c.h.b16 %v1148
    %v1347 = vunpack.c.l.b16 %v1149
    %v1348 = vunpack.c.h.b16 %v1149
    %v1349 = vunpack.c.l.b16 %v1150
    %v1350 = vunpack.c.h.b16 %v1150
    %v1351 = vunpack.c.l.b16 %v1151
    %v1352 = vunpack.c.h.b16 %v1151
    %v1353 = vunpack.c.l.b16 %v1152
    %v1354 = vunpack.c.h.b16 %v1152
    %v1355 = vunpack.c.l.b16 %v1153
    %v1356 = vunpack.c.h.b16 %v1153
    %v1357 = vunpack.c.l.b16 %v1154
    %v1358 = vunpack.c.h.b16 %v1154
    %v1359 = vpack.c.b16 %v1233, %v1231
    %v1360 = vpack.c.b16 %v1234, %v1232
    %v1361 = vpack.c.b16 %v1237, %v1235
    %v1362 = vpack.c.b16 %v1238, %v1236
    %v1363 = vpack.c.b16 %v1241, %v1239
    %v1364 = vpack.c.b16 %v1242, %v1240
    %v1365 = vpack.c.b16 %v1245, %v1243
    %v1366 = vpack.c.b16 %v1246, %v1244
    %v1367 = vpack.c.b16 %v1249, %v1247
    %v1368 = vpack.c.b16 %v1250, %v1248
    %v1369 = vpack.c.b16 %v1253, %v1251
    %v1370 = vpack.c.b16 %v1254, %v1252
    %v1371 = vpack.c.b16 %v1257, %v1255
    %v1372 = vpack.c.b16 %v1258, %v1256
    %v1373 = vpack.c.b16 %v1261, %v1259
    %v1374 = vpack.c.b16 %v1262, %v1260
    %v1375 = vpack.c.b16 %v1265, %v1263
    %v1376 = vpack.c.b16 %v1266, %v1264
    %v1377 = vpack.c.b16 %v1269, %v1267
    %v1378 = vpack.c.b16 %v1270, %v1268
    %v1379 = vpack.c.b16 %v1273, %v1271
    %v1380 = vpack.c.b16 %v1274, %v1272
    %v1381 = vpack.c.b16 %v1277, %v1275
    %v1382 = vpack.c.b16 %v1278, %v1276
    %v1383 = vpack.c.b16 %v1281, %v1279
    %v1384 = vpack.c.b16 %v1282, %v1280
    %v1385 = vpack.c.b16 %v1285, %v1283
    %v1386 = vpack.c.b16 %v1286, %v1284
    %v1387 = vpack.c.b16 %v1289, %v1287
    %v1388 = vpack.c.b16 %v1290, %v1288
    %v1389 = vpack.c.b16 %v1293, %v1291
    %v1390 = vpack.c.b16 %v1294, %v1292
    %v1391 = vpack.c.b16 %v1297, %v1295
    %v1392 = vpack.c.b16 %v1298, %v1296
    %v1393 = vpack.c.b16 %v1301, %v1299
    %v1394 = vpack.c.b16 %v1302, %v1300
    %v1395 = vpack.c.b16 %v1305, %v1303
    %v1396 = vpack.c.b16 %v1306, %v1304
    %v1397 = vpack.c.b16 %v1309, %v1307
    %v1398 = vpack.c.b16 %v1310, %v1308
    %v1399 = vpack.c.b16 %v1313, %v1311
    %v1400 = vpack.c.b16 %v1314, %v1312
    %v1401 = vpack.c.b16 %v1317, %v1315
    %v1402 = vpack.c.b16 %v1318, %v1316
    %v1403 = vpack.c.b16 %v1321, %v1319
    %v1404 = vpack.c.b16 %v1322, %v1320
    %v1405 = vpack.c.b16 %v1325, %v1323
    %v1406 = vpack.c.b16 %v1326, %v1324
    %v1407 = vpack.c.b16 %v1329, %v1327
    %v1408 = vpack.c.b16 %v1330, %v1328
    %v1409 = vpack.c.b16 %v1333, %v1331
    %v1410 = vpack.c.b16 %v1334, %v1332
    %v1411 = vpack.c.b16 %v1337, %v1335
    %v1412 = vpack.c.b16 %v1338, %v1336
    %v1413 = vpack.c.b16 %v1341, %v1339
    %v1414 = vpack.c.b16 %v1342, %v1340
    %v1415 = vpack.c.b16 %v1345, %v1343
    %v1416 = vpack.c.b16 %v1346, %v1344
    %v1417 = vpack.c.b16 %v1349, %v1347
    %v1418 = vpack.c.b16 %v1350, %v1348
    %v1419 = vpack.c.b16 %v1353, %v1351
    %v1420 = vpack.c.b16 %v1354, %v1352
    %v1421 = vpack.c.b16 %v1357, %v1355
    %v1422 = vpack.c.b16 %v1358, %v1356
    %1487 = vmatprep.subr.bf16.mxu0 %v1360
    %1488 = vmatpush1.bf16.msra.mxu0 %v1359
    %1489 = vmatprep.subr.bf16.mxu0 %v1362
    %1490 = vmatpush1.bf16.msra.mxu0 %v1361
    %1491 = vmatprep.subr.bf16.mxu0 %v1364
    %1492 = vmatpush1.bf16.msra.mxu0 %v1363
    %1493 = vmatprep.subr.bf16.mxu0 %v1366
    %1494 = vmatpush1.bf16.msra.mxu0 %v1365
    %1495 = vmatprep.subr.bf16.mxu0 %v1368
    %1496 = vmatpush1.bf16.msra.mxu0 %v1367
    %1497 = vmatprep.subr.bf16.mxu0 %v1370
    %1498 = vmatpush1.bf16.msra.mxu0 %v1369
    %1499 = vmatprep.subr.bf16.mxu0 %v1372
    %1500 = vmatpush1.bf16.msra.mxu0 %v1371
    %1501 = vmatprep.subr.bf16.mxu0 %v1374
    %1502 = vmatpush1.bf16.msra.mxu0 %v1373
    %1503 = vmatprep.subr.bf16.mxu0 %v1376
    %1504 = vmatpush1.bf16.msra.mxu0 %v1375
    %1505 = vmatprep.subr.bf16.mxu0 %v1378
    %1506 = vmatpush1.bf16.msra.mxu0 %v1377
    %1507 = vmatprep.subr.bf16.mxu0 %v1380
    %1508 = vmatpush1.bf16.msra.mxu0 %v1379
    %1509 = vmatprep.subr.bf16.mxu0 %v1382
    %1510 = vmatpush1.bf16.msra.mxu0 %v1381
    %1511 = vmatprep.subr.bf16.mxu0 %v1384
    %1512 = vmatpush1.bf16.msra.mxu0 %v1383
    %1513 = vmatprep.subr.bf16.mxu0 %v1386
    %1514 = vmatpush1.bf16.msra.mxu0 %v1385
    %1515 = vmatprep.subr.bf16.mxu0 %v1388
    %1516 = vmatpush1.bf16.msra.mxu0 %v1387
    %1517 = vmatprep.subr.bf16.mxu0 %v1390
    %1518 = vmatpush1.bf16.msra.mxu0 %v1389
    %1519 = vmatprep.mubr.bf16.mxu0 %v1088
    %1520 = vmatmul.mubr.bf16.gmra.mrb[0].mxu0 %v1087
    %v1521 = vpop.f32.mrb[0].mxu0
    %v1522 = vadd.f32 %v1160, %v1521
    %v1523 = vpop.f32.mrb[0].mxu0
    %v1524 = vadd.f32 %v1164, %v1523
    %v1525 = vpop.f32.mrb[0].mxu0
    %v1526 = vpop.f32.mrb[0].mxu0
    %1527 = vdwg.mxu0
    %1528 = vmatprep.subr.bf16.mxu0 %v1392
    %1529 = vmatpush1.bf16.msra.mxu0 %v1391
    %1530 = vmatprep.subr.bf16.mxu0 %v1394
    %1531 = vmatpush1.bf16.msra.mxu0 %v1393
    %1532 = vmatprep.subr.bf16.mxu0 %v1396
    %1533 = vmatpush1.bf16.msra.mxu0 %v1395
    %1534 = vmatprep.subr.bf16.mxu0 %v1398
    %1535 = vmatpush1.bf16.msra.mxu0 %v1397
    %1536 = vmatprep.subr.bf16.mxu0 %v1400
    %1537 = vmatpush1.bf16.msra.mxu0 %v1399
    %1538 = vmatprep.subr.bf16.mxu0 %v1402
    %1539 = vmatpush1.bf16.msra.mxu0 %v1401
    %1540 = vmatprep.subr.bf16.mxu0 %v1404
    %1541 = vmatpush1.bf16.msra.mxu0 %v1403
    %1542 = vmatprep.subr.bf16.mxu0 %v1406
    %1543 = vmatpush1.bf16.msra.mxu0 %v1405
    %1544 = vmatprep.subr.bf16.mxu0 %v1408
    %1545 = vmatpush1.bf16.msra.mxu0 %v1407
    %1546 = vmatprep.subr.bf16.mxu0 %v1410
    %1547 = vmatpush1.bf16.msra.mxu0 %v1409
    %1548 = vmatprep.subr.bf16.mxu0 %v1412
    %1549 = vmatpush1.bf16.msra.mxu0 %v1411
    %1550 = vmatprep.subr.bf16.mxu0 %v1414
    %1551 = vmatpush1.bf16.msra.mxu0 %v1413
    %1552 = vmatprep.subr.bf16.mxu0 %v1416
    %1553 = vmatpush1.bf16.msra.mxu0 %v1415
    %1554 = vmatprep.subr.bf16.mxu0 %v1418
    %1555 = vmatpush1.bf16.msra.mxu0 %v1417
    %1556 = vmatprep.subr.bf16.mxu0 %v1420
    %1557 = vmatpush1.bf16.msra.mxu0 %v1419
    %1558 = vmatprep.subr.bf16.mxu0 %v1422
    %1559 = vmatpush1.bf16.msra.mxu0 %v1421
    %1560 = vmatprep.mubr.bf16.mxu0 %v1090
    %1561 = vmatmul.mubr.bf16.gmra.mrb[0].mxu0 %v1089
    %v1562 = vpop.f32.mrb[0].mxu0
    %v1563 = vadd.f32 %v1522, %v1562
    %v1564 = vpop.f32.mrb[0].mxu0
    %v1565 = vadd.f32 %v1524, %v1564
    %v1566 = vpop.f32.mrb[0].mxu0
    %v1567 = vpop.f32.mrb[0].mxu0
    %1568 = vdwg.mxu0
    %v1569 = vxor.u32 %v1563, 2147483648
    %v1570 = vxor.u32 %v1565, 2147483648
    %v1571 = vmul.f32 %v1569, 1.442695
    %v1572 = vpow.pop %v1571
    %v1573 = vmul.f32 %v1570, 1.442695
    %v1574 = vpow.pop %v1573
    %v1575 = vadd.f32 %v1572, 1.0
    %v1576 = vadd.f32 %v1574, 1.0
    %v1577 = vrcp.pop %v1575
    %v1578 = vmul.f32 1.0, %v1577
    %v1579 = vrcp.pop %v1576
    %v1580 = vmul.f32 1.0, %v1579
    %v1583 = vcombine.low %v1578, %v1580
    %v1584 = vcombine.high %v1578, %v1580
    %v1586 = vunpack.c.l.s4 1983009808
    %v1587 = vunpack.c.0.s8 %v1586
    %v1588 = vlaneseq
    %v1589 = vshrl.u32 %v1588, 7
    %v1590 = vsub.s32 %v1587, %v1589
    %v1591 = vrot.slane %v1583, %v1590
    %v1593 = vunpack.c.l.s4 1983009808
    %v1594 = vunpack.c.0.s8 %v1593
    %v1595 = vlaneseq
    %v1596 = vshrl.u32 %v1595, 7
    %v1597 = vsub.s32 %v1594, %v1596
    %v1598 = vrot.slane %v1584, %v1597
    %v1599 = vcombine.high %v1591, %v1591
    %v1600 = vcombine.high %v1598, %v1598
    %1605 = vst [vmem:[#allocation7] sm:$0xf] %v1591
    %1606 = vst [vmem:[#allocation7 + $0x4] sm:$0xf] %v1599
    %1607 = vst [vmem:[#allocation7 + $0x8] sm:$0xf] %v1598
    %1608 = vst [vmem:[#allocation7 + $0xc] sm:$0xf] %v1600
    // Predicated region
    $region50: #{tpu_custom_call.1} parent=1 // pred_check
      _
    $region51: #{tpu_custom_call.1} parent=1 // pred_check_branch
      %1610 = sbr.rel (0) target = $region53
    $region52: #{tpu_custom_call.1} parent=1 // pred_region
      %s1612 = ssub.s32 256, 64
      %1613 = vsyncadd [#allocation4], %s1612
      %s1614 = sshll.u32 [#allocation7], 4
      %s1615 = int_to_ptr.vmem [resolvable:$true] %s1614
      %1620 = dma.vmem_to_hbm [thread:$0]  %s1615, 64, %s10, [#allocation4], 64, 64, 4
    $region53: #{tpu_custom_call.1} parent=1 // pred_fallthru
      _
    // Predicated region
    $region54: #{tpu_custom_call.1} parent=1 // pred_check
      _
    $region55: #{tpu_custom_call.1} parent=1 // pred_check_branch
      %1622 = sbr.rel (0) target = $region57
    $region56: #{tpu_custom_call.1} parent=1 // pred_region
      %s1624 = ssub.s32 128, 32
      %1625 = vsyncadd [#allocation9], %s1624
      %s1626 = sshll.u32 [#allocation8], 4
      %s1627 = int_to_ptr.vmem [resolvable:$true] %s1626
      %1632 = dma.vmem_to_hbm [thread:$0]  %s1627, 32, %s11, [#allocation9], 32, 32, 2
    $region57: #{tpu_custom_call.1} parent=1 // pred_fallthru
      _
    // Predicated region
    $region58: #{tpu_custom_call.1} parent=1 // pred_check
      _
    $region59: #{tpu_custom_call.1} parent=1 // pred_check_branch
      %1634 = sbr.rel (0) target = $region61
    $region60: #{tpu_custom_call.1} parent=1 // pred_region
      %1635 = dma.done [#allocation4], 256
    $region61: #{tpu_custom_call.1} parent=1 // pred_fallthru
      _
    // Predicated region
    $region62: #{tpu_custom_call.1} parent=1 // pred_check
      _
    $region63: #{tpu_custom_call.1} parent=1 // pred_check_branch
      %1637 = sbr.rel (0) target = $region65
    $region64: #{tpu_custom_call.1} parent=1 // pred_region
      %1638 = dma.done [#allocation9], 128
    $region65: #{tpu_custom_call.1} parent=1 // pred_fallthru
      _
    %1639 = vsyncpa [#allocation3], 1
    %1640 = vsyncpa [#allocation6], 1
    %1641 = vsyncpa [#allocation4], 1
    %1642 = vsyncpa [#allocation9], 1

</llo_original>
